<compile_context>
chip_gen: v7x
topology: tpu7x:2x2x1
jax: 0.10.0
libtpu: 0.0.40
codegen_flags: <defaults>
</compile_context>

<pallas_src>
import math
import jax
import jax.numpy as jnp
from jax.experimental import pallas as pl
from jax.experimental.pallas import tpu as pltpu


def _mha_kernel(q_ref, k_ref, v_ref, mask_ref,
                wq_ref, wk_ref, wv_ref, wo_ref, bo_ref,
                out_ref):
    # q_ref: (H, TQ, D)   k_ref/v_ref: (H, Lk, D)   mask_ref: (TQ, Lk)
    # wq/wk/wv: (D, D) transposed weights (scale already folded into wq)
    # wo_ref: (H, D, E)   bo_ref: (1, E)   out_ref: (TQ, E)
    H, TQ, D = q_ref.shape
    Lk = k_ref.shape[1]
    dt = q_ref.dtype

    # ---- head projections, batched over heads: (H*L, D) @ (D, D) on the MXU ----
    qh = jnp.dot(q_ref[...].reshape(H * TQ, D), wq_ref[...],
                 preferred_element_type=jnp.float32).reshape(H, TQ, D).astype(dt)
    kh = jnp.dot(k_ref[...].reshape(H * Lk, D), wk_ref[...],
                 preferred_element_type=jnp.float32).reshape(H, Lk, D).astype(dt)
    vh = jnp.dot(v_ref[...].reshape(H * Lk, D), wv_ref[...],
                 preferred_element_type=jnp.float32).reshape(H, Lk, D).astype(dt)

    # ---- attention scores for all heads at once (scale folded into Wq) ----
    scores = jnp.einsum('hqd,hkd->hqk', qh, kh,
                        preferred_element_type=jnp.float32)          # (H, TQ, Lk) f32
    # masked_fill semantics: masked logits pinned to -1e20 (post-softmax identical to
    # the module's "fill then divide" ordering).
    mask = mask_ref[...]                                             # (TQ, Lk)
    scores = jnp.where(mask[None, :, :] == 0, jnp.float32(-1e20), scores)

    # ---- softmax over keys (f32 stats, EUP reciprocal) ----
    scores = scores - jnp.max(scores, axis=-1, keepdims=True)
    p = jnp.exp(scores)
    p = p * pl.reciprocal(jnp.sum(p, axis=-1, keepdims=True), approx=True)
    # TODO(synk): for long Lk, switch this block to an online-softmax loop over Lk
    # tiles (flash-style) instead of materializing the full (H, TQ, Lk) scores.

    # ---- PV and output projection ----
    ctx = jnp.einsum('hqk,hkd->hqd', p.astype(dt), vh,
                     preferred_element_type=jnp.float32).astype(dt)  # (H, TQ, D)
    per_head = jnp.einsum('hqd,hde->hqe', ctx, wo_ref[...],
                          preferred_element_type=jnp.float32)        # (H, TQ, E)
    out = per_head.sum(axis=0) + bo_ref[...].astype(jnp.float32)     # (TQ, E)
    out_ref[...] = out.astype(out_ref.dtype)


def multi_head_attention(query, value, key, mask, params, number_of_heads):
    """query/value/key: (B, L, E); mask: (B, 1, Lq, Lk) int32; returns (B, Lq, E)."""
    B, Lq, E = query.shape
    Lk = key.shape[1]
    H = number_of_heads
    D = E // H
    assert D * H == E
    assert value.shape[1] == Lk, "key/value lengths must match"

    wq, wk, wv, wo, bo = (params['wq'], params['wk'], params['wv'],
                          params['wo'], params['bo'])

    # ---- glue: per-head layout (B, H, L, D) ----
    # NOTE: this transpose is one extra HBM pass over q/k/v outside the kernel;
    # acceptable here, fuse into the producer for production use.
    q4 = query.reshape(B, Lq, H, D).transpose(0, 2, 1, 3)   # (B, H, Lq, D)
    k4 = key.reshape(B, Lk, H, D).transpose(0, 2, 1, 3)     # (B, H, Lk, D)
    v4 = value.reshape(B, Lk, H, D).transpose(0, 2, 1, 3)   # (B, H, Lk, D)

    scale = 1.0 / (float(E) ** 0.5)            # module divides by embedding_size ** 0.5
    wq_ts = (wq.T * scale).astype(query.dtype)  # fold scale into the Q projection
    wk_t = wk.T.astype(key.dtype)
    wv_t = wv.T.astype(value.dtype)
    wo_t = wo.T.reshape(H, D, E).astype(query.dtype)   # rows of W.T indexed by h*D+d
    bo2 = bo.reshape(1, E).astype(jnp.float32)

    # ---- Lq tiling: bounds VMEM independent of sequence length ----
    TQ = Lq if Lq <= 128 else 128
    grid = (B, pl.cdiv(Lq, TQ))

    # TODO(synk): for structured (e.g. causal) masks, generate the mask in-kernel via
    # broadcasted_iota instead of DMAing an int32 (Lq, Lk) tensor per batch.
    out = pl.pallas_call(
        _mha_kernel,
        out_shape=jax.ShapeDtypeStruct((B, Lq, E), query.dtype),
        grid_spec=pltpu.PrefetchScalarGridSpec(
            num_scalar_prefetch=0,
            grid=grid,
            in_specs=[
                pl.BlockSpec((None, H, TQ, D), lambda b, qi: (b, 0, qi, 0)),     # q
                pl.BlockSpec((None, H, Lk, D), lambda b, qi: (b, 0, 0, 0)),      # k (resident over qi)
                pl.BlockSpec((None, H, Lk, D), lambda b, qi: (b, 0, 0, 0)),      # v (resident over qi)
                pl.BlockSpec((None, None, TQ, Lk), lambda b, qi: (b, 0, qi, 0)), # mask
                pl.BlockSpec((D, D), lambda b, qi: (0, 0)),                      # wq.T * 1/sqrt(E)
                pl.BlockSpec((D, D), lambda b, qi: (0, 0)),                      # wk.T
                pl.BlockSpec((D, D), lambda b, qi: (0, 0)),                      # wv.T
                pl.BlockSpec((H, D, E), lambda b, qi: (0, 0, 0)),                # wo.T per-head
                pl.BlockSpec((1, E), lambda b, qi: (0, 0)),                      # bias
            ],
            out_specs=pl.BlockSpec((None, TQ, E), lambda b, qi: (b, qi, 0)),
        ),
        compiler_params=pltpu.CompilerParams(
            dimension_semantics=("parallel", "parallel")),
    )(q4, k4, v4, mask, wq_ts, wk_t, wv_t, wo_t, bo2)
    return out


def reference_mha(query, value, key, mask, params, H):
    """Plain-JAX mirror of the PyTorch forward, for verification."""
    wq, wk, wv, wo, bo = (params['wq'], params['wk'], params['wv'],
                          params['wo'], params['bo'])
    B, Lq, E = query.shape
    D = E // H
    vs = value.reshape(B, -1, H, D) @ wv.T
    ks = key.reshape(B, -1, H, D) @ wk.T
    qs = query.reshape(B, Lq, H, D) @ wq.T
    att = jnp.einsum('bqhd,bkhd->bhqk', qs, ks)
    att = jnp.where(mask == 0, jnp.float32(-1e20), att)
    att = att / (E ** 0.5)
    att = jax.nn.softmax(att, axis=3)
    out = jnp.einsum('bhql,blhd->bqhd', att, vs).reshape(B, Lq, E)
    return out @ wo.T + bo


if __name__ == "__main__":
    B, L, E, H = 2, 8, 32, 4
    D = E // H

    root = jax.random.PRNGKey(0)
    kq, kk, kv, kwq, kwk, kwv, kwo, kbo = jax.random.split(root, 8)

    query = jax.random.normal(kq, (B, L, E), jnp.float32)
    key_in = jax.random.normal(kk, (B, L, E), jnp.float32)
    value = jax.random.normal(kv, (B, L, E), jnp.float32)

    # causal-ish mask, broadcast over heads: (B, 1, Lq, Lk), 0 == masked
    causal = (jnp.arange(L)[:, None] >= jnp.arange(L)[None, :]).astype(jnp.int32)
    mask = jnp.broadcast_to(causal[None, None, :, :], (B, 1, L, L))

    # deterministic parameter init (same shapes as the nn.Module)
    params = {
        'wq': jax.random.normal(kwq, (D, D), jnp.float32) / math.sqrt(D),
        'wk': jax.random.normal(kwk, (D, D), jnp.float32) / math.sqrt(D),
        'wv': jax.random.normal(kwv, (D, D), jnp.float32) / math.sqrt(D),
        'wo': jax.random.normal(kwo, (E, E), jnp.float32) / math.sqrt(E),
        'bo': jax.random.normal(kbo, (E,), jnp.float32) * 0.01,
    }

    out = multi_head_attention(query, value, key_in, mask, params, H)
    out = jax.block_until_ready(out)

    ref = reference_mha(query, value, key_in, mask, params, H)
    assert out.shape == (B, L, E)
    # slightly relaxed tolerance: approx EUP reciprocal + scale folded into Wq
    assert jnp.allclose(out, ref, atol=2e-3, rtol=2e-3), "kernel mismatch vs reference"

    print("KERNEL_OK")
</pallas_src>

<mosaic_0001>
module attributes {stable_mosaic.version = 11 : i64} {
  func.func @_mha_kernel(%arg0: i32, %arg1: i32, %arg2: memref<1x4x8x8xf32, #tpu.memory_space<vmem>>, %arg3: memref<1x4x8x8xf32, #tpu.memory_space<vmem>>, %arg4: memref<1x4x8x8xf32, #tpu.memory_space<vmem>>, %arg5: memref<1x1x8x8xi32, #tpu.memory_space<vmem>>, %arg6: memref<8x8xf32, #tpu.memory_space<vmem>>, %arg7: memref<8x8xf32, #tpu.memory_space<vmem>>, %arg8: memref<8x8xf32, #tpu.memory_space<vmem>>, %arg9: memref<4x8x32xf32, #tpu.memory_space<vmem>>, %arg10: memref<1x32xf32, #tpu.memory_space<vmem>>, %arg11: memref<1x8x32xf32, #tpu.memory_space<vmem>>) attributes {dimension_semantics = [#tpu.dimension_semantics<parallel>, #tpu.dimension_semantics<parallel>], iteration_bounds = array<i64: 2, 1>, scalar_prefetch = 0 : i64, scratch_operands = 0 : i64, tpu.core_type = #tpu.core_type<tc>, window_params = [{transform_indices = @transform_0, window_bounds = array<i64: 1, 4, 8, 8>}, {transform_indices = @transform_1, window_bounds = array<i64: 1, 4, 8, 8>}, {transform_indices = @transform_2, window_bounds = array<i64: 1, 4, 8, 8>}, {transform_indices = @transform_3, window_bounds = array<i64: 1, 1, 8, 8>}, {pipeline_mode = #tpu.pipeline_mode<synchronous>, transform_indices = @transform_4, window_bounds = array<i64: 8, 8>}, {pipeline_mode = #tpu.pipeline_mode<synchronous>, transform_indices = @transform_5, window_bounds = array<i64: 8, 8>}, {pipeline_mode = #tpu.pipeline_mode<synchronous>, transform_indices = @transform_6, window_bounds = array<i64: 8, 8>}, {pipeline_mode = #tpu.pipeline_mode<synchronous>, transform_indices = @transform_7, window_bounds = array<i64: 4, 8, 32>}, {pipeline_mode = #tpu.pipeline_mode<synchronous>, transform_indices = @transform_8, window_bounds = array<i64: 1, 32>}, {transform_indices = @transform_9, window_bounds = array<i64: 1, 8, 32>}]} {
    %c0 = arith.constant 0 : index
    %c0_0 = arith.constant 0 : index
    %c0_1 = arith.constant 0 : index
    %c0_2 = arith.constant 0 : index
    %0 = vector.load %arg2[%c0, %c0_0, %c0_1, %c0_2] : memref<1x4x8x8xf32, #tpu.memory_space<vmem>>, vector<1x4x8x8xf32>
    %1 = vector.shape_cast %0 : vector<1x4x8x8xf32> to vector<4x8x8xf32>
    %2 = vector.shape_cast %1 : vector<4x8x8xf32> to vector<32x8xf32>
    %c0_3 = arith.constant 0 : index
    %c0_4 = arith.constant 0 : index
    %3 = vector.load %arg6[%c0_3, %c0_4] : memref<8x8xf32, #tpu.memory_space<vmem>>, vector<8x8xf32>
    %cst = arith.constant dense<0.000000e+00> : vector<32x8xf32>
    %4 = tpu.matmul %2, %3, %cst {dimension_numbers = #tpu.dot_dimension_numbers<[1], [0], [0], [1], [0, 0, 1, 1], [], []>} : vector<32x8xf32>, vector<8x8xf32>, vector<32x8xf32> -> vector<32x8xf32>
    %5 = vector.shape_cast %4 : vector<32x8xf32> to vector<4x8x8xf32>
    %c0_5 = arith.constant 0 : index
    %c0_6 = arith.constant 0 : index
    %c0_7 = arith.constant 0 : index
    %c0_8 = arith.constant 0 : index
    %6 = vector.load %arg3[%c0_5, %c0_6, %c0_7, %c0_8] : memref<1x4x8x8xf32, #tpu.memory_space<vmem>>, vector<1x4x8x8xf32>
    %7 = vector.shape_cast %6 : vector<1x4x8x8xf32> to vector<4x8x8xf32>
    %8 = vector.shape_cast %7 : vector<4x8x8xf32> to vector<32x8xf32>
    %c0_9 = arith.constant 0 : index
    %c0_10 = arith.constant 0 : index
    %9 = vector.load %arg7[%c0_9, %c0_10] : memref<8x8xf32, #tpu.memory_space<vmem>>, vector<8x8xf32>
    %cst_11 = arith.constant dense<0.000000e+00> : vector<32x8xf32>
    %10 = tpu.matmul %8, %9, %cst_11 {dimension_numbers = #tpu.dot_dimension_numbers<[1], [0], [0], [1], [0, 0, 1, 1], [], []>} : vector<32x8xf32>, vector<8x8xf32>, vector<32x8xf32> -> vector<32x8xf32>
    %11 = vector.shape_cast %10 : vector<32x8xf32> to vector<4x8x8xf32>
    %c0_12 = arith.constant 0 : index
    %c0_13 = arith.constant 0 : index
    %c0_14 = arith.constant 0 : index
    %c0_15 = arith.constant 0 : index
    %12 = vector.load %arg4[%c0_12, %c0_13, %c0_14, %c0_15] : memref<1x4x8x8xf32, #tpu.memory_space<vmem>>, vector<1x4x8x8xf32>
    %13 = vector.shape_cast %12 : vector<1x4x8x8xf32> to vector<4x8x8xf32>
    %14 = vector.shape_cast %13 : vector<4x8x8xf32> to vector<32x8xf32>
    %c0_16 = arith.constant 0 : index
    %c0_17 = arith.constant 0 : index
    %15 = vector.load %arg8[%c0_16, %c0_17] : memref<8x8xf32, #tpu.memory_space<vmem>>, vector<8x8xf32>
    %cst_18 = arith.constant dense<0.000000e+00> : vector<32x8xf32>
    %16 = tpu.matmul %14, %15, %cst_18 {dimension_numbers = #tpu.dot_dimension_numbers<[1], [0], [0], [1], [0, 0, 1, 1], [], []>} : vector<32x8xf32>, vector<8x8xf32>, vector<32x8xf32> -> vector<32x8xf32>
    %17 = vector.shape_cast %16 : vector<32x8xf32> to vector<4x8x8xf32>
    "tpu.trace_start"() <{level = 10 : i32, message = "hqd,hkd->hqk"}> : () -> ()
    %cst_19 = arith.constant dense<0.000000e+00> : vector<4x8x8xf32>
    %18 = tpu.matmul %5, %11, %cst_19 {dimension_numbers = #tpu.dot_dimension_numbers<[2], [2], [1], [1], [0, 0, 0, 1, 1, 1], [0], [0]>} : vector<4x8x8xf32>, vector<4x8x8xf32>, vector<4x8x8xf32> -> vector<4x8x8xf32>
    "tpu.trace_stop"() : () -> ()
    %c0_20 = arith.constant 0 : index
    %c0_21 = arith.constant 0 : index
    %c0_22 = arith.constant 0 : index
    %c0_23 = arith.constant 0 : index
    %19 = vector.load %arg5[%c0_20, %c0_21, %c0_22, %c0_23] : memref<1x1x8x8xi32, #tpu.memory_space<vmem>>, vector<1x1x8x8xi32>
    %20 = vector.shape_cast %19 : vector<1x1x8x8xi32> to vector<8x8xi32>
    %21 = vector.shape_cast %20 : vector<8x8xi32> to vector<1x8x8xi32>
    %c0_i32 = arith.constant 0 : i32
    %22 = vector.broadcast %c0_i32 : i32 to vector<1x8x8xi32>
    %23 = arith.cmpi eq, %21, %22 : vector<1x8x8xi32>
    %cst_24 = arith.constant -1.000000e+20 : f32
    %24 = vector.shape_cast %23 : vector<1x8x8xi1> to vector<1x8x8xi1>
    %25 = vector.broadcast %24 : vector<1x8x8xi1> to vector<4x8x8xi1>
    %26 = vector.broadcast %cst_24 : f32 to vector<4x8x8xf32>
    %27 = arith.select %25, %26, %18 : vector<4x8x8xi1>, vector<4x8x8xf32>
    %cst_25 = arith.constant dense<0xFF800000> : vector<4x8xf32>
    %28 = vector.multi_reduction <maximumf>, %27, %cst_25 [2] : vector<4x8x8xf32> to vector<4x8xf32>
    %29 = vector.shape_cast %28 : vector<4x8xf32> to vector<4x8x1xf32>
    %30 = vector.broadcast %29 : vector<4x8x1xf32> to vector<4x8x8xf32>
    %31 = arith.subf %27, %30 : vector<4x8x8xf32>
    %32 = math.exp %31 : vector<4x8x8xf32>
    %cst_26 = arith.constant dense<0.000000e+00> : vector<4x8xf32>
    %33 = vector.multi_reduction <add>, %32, %cst_26 [2] : vector<4x8x8xf32> to vector<4x8xf32>
    %34 = vector.shape_cast %33 : vector<4x8xf32> to vector<4x8x1xf32>
    %35 = tpu.reciprocal %34 {approx = true} : vector<4x8x1xf32> -> vector<4x8x1xf32>
    %36 = vector.broadcast %35 : vector<4x8x1xf32> to vector<4x8x8xf32>
    %37 = arith.mulf %32, %36 : vector<4x8x8xf32>
    "tpu.trace_start"() <{level = 10 : i32, message = "hqk,hkd->hqd"}> : () -> ()
    %cst_27 = arith.constant dense<0.000000e+00> : vector<4x8x8xf32>
    %38 = tpu.matmul %37, %17, %cst_27 {dimension_numbers = #tpu.dot_dimension_numbers<[2], [1], [1], [2], [0, 0, 0, 1, 1, 2], [0], [0]>} : vector<4x8x8xf32>, vector<4x8x8xf32>, vector<4x8x8xf32> -> vector<4x8x8xf32>
    "tpu.trace_stop"() : () -> ()
    %c0_28 = arith.constant 0 : index
    %c0_29 = arith.constant 0 : index
    %c0_30 = arith.constant 0 : index
    %39 = vector.load %arg9[%c0_28, %c0_29, %c0_30] : memref<4x8x32xf32, #tpu.memory_space<vmem>>, vector<4x8x32xf32>
    "tpu.trace_start"() <{level = 10 : i32, message = "hqd,hde->hqe"}> : () -> ()
    %cst_31 = arith.constant dense<0.000000e+00> : vector<4x8x32xf32>
    %40 = tpu.matmul %38, %39, %cst_31 {dimension_numbers = #tpu.dot_dimension_numbers<[2], [1], [1], [2], [0, 0, 0, 1, 1, 2], [0], [0]>} : vector<4x8x8xf32>, vector<4x8x32xf32>, vector<4x8x32xf32> -> vector<4x8x32xf32>
    "tpu.trace_stop"() : () -> ()
    %cst_32 = arith.constant dense<0.000000e+00> : vector<8x32xf32>
    %41 = vector.multi_reduction <add>, %40, %cst_32 [0] : vector<4x8x32xf32> to vector<8x32xf32>
    %c0_33 = arith.constant 0 : index
    %c0_34 = arith.constant 0 : index
    %42 = vector.load %arg10[%c0_33, %c0_34] : memref<1x32xf32, #tpu.memory_space<vmem>>, vector<1x32xf32>
    %43 = vector.broadcast %42 : vector<1x32xf32> to vector<8x32xf32>
    %44 = arith.addf %41, %43 : vector<8x32xf32>
    %c0_35 = arith.constant 0 : index
    %c0_36 = arith.constant 0 : index
    %c0_37 = arith.constant 0 : index
    %45 = vector.load %arg11[%c0_35, %c0_36, %c0_37] : memref<1x8x32xf32, #tpu.memory_space<vmem>>, vector<1x8x32xf32>
    %46 = vector.shape_cast %45 : vector<1x8x32xf32> to vector<8x32xf32>
    %47 = vector.shape_cast %44 : vector<8x32xf32> to vector<1x8x32xf32>
    tpu.vector_store %arg11[%c0_35, %c0_36, %c0_37], %47 {strides = array<i32>} : memref<1x8x32xf32, #tpu.memory_space<vmem>>, vector<1x8x32xf32>,
    return
  }
  func.func @transform_0(%arg0: i32, %arg1: i32) -> (i32, i32, i32, i32) {
    %c0_i32 = arith.constant 0 : i32
    %c0_i32_0 = arith.constant 0 : i32
    %c0_i32_1 = arith.constant 0 : i32
    return %arg0, %c0_i32, %arg1, %c0_i32_0 : i32, i32, i32, i32
  }
  func.func @transform_1(%arg0: i32, %arg1: i32) -> (i32, i32, i32, i32) {
    %c0_i32 = arith.constant 0 : i32
    %c0_i32_0 = arith.constant 0 : i32
    %c0_i32_1 = arith.constant 0 : i32
    %c0_i32_2 = arith.constant 0 : i32
    return %arg0, %c0_i32, %c0_i32_0, %c0_i32_1 : i32, i32, i32, i32
  }
  func.func @transform_2(%arg0: i32, %arg1: i32) -> (i32, i32, i32, i32) {
    %c0_i32 = arith.constant 0 : i32
    %c0_i32_0 = arith.constant 0 : i32
    %c0_i32_1 = arith.constant 0 : i32
    %c0_i32_2 = arith.constant 0 : i32
    return %arg0, %c0_i32, %c0_i32_0, %c0_i32_1 : i32, i32, i32, i32
  }
  func.func @transform_3(%arg0: i32, %arg1: i32) -> (i32, i32, i32, i32) {
    %c0_i32 = arith.constant 0 : i32
    %c0_i32_0 = arith.constant 0 : i32
    %c0_i32_1 = arith.constant 0 : i32
    return %arg0, %c0_i32, %arg1, %c0_i32_0 : i32, i32, i32, i32
  }
  func.func @transform_4(%arg0: i32, %arg1: i32) -> (i32, i32) {
    %c0_i32 = arith.constant 0 : i32
    %c0_i32_0 = arith.constant 0 : i32
    %c0_i32_1 = arith.constant 0 : i32
    return %c0_i32, %c0_i32_0 : i32, i32
  }
  func.func @transform_5(%arg0: i32, %arg1: i32) -> (i32, i32) {
    %c0_i32 = arith.constant 0 : i32
    %c0_i32_0 = arith.constant 0 : i32
    %c0_i32_1 = arith.constant 0 : i32
    return %c0_i32, %c0_i32_0 : i32, i32
  }
  func.func @transform_6(%arg0: i32, %arg1: i32) -> (i32, i32) {
    %c0_i32 = arith.constant 0 : i32
    %c0_i32_0 = arith.constant 0 : i32
    %c0_i32_1 = arith.constant 0 : i32
    return %c0_i32, %c0_i32_0 : i32, i32
  }
  func.func @transform_7(%arg0: i32, %arg1: i32) -> (i32, i32, i32) {
    %c0_i32 = arith.constant 0 : i32
    %c0_i32_0 = arith.constant 0 : i32
    %c0_i32_1 = arith.constant 0 : i32
    %c0_i32_2 = arith.constant 0 : i32
    return %c0_i32, %c0_i32_0, %c0_i32_1 : i32, i32, i32
  }
  func.func @transform_8(%arg0: i32, %arg1: i32) -> (i32, i32) {
    %c0_i32 = arith.constant 0 : i32
    %c0_i32_0 = arith.constant 0 : i32
    %c0_i32_1 = arith.constant 0 : i32
    return %c0_i32, %c0_i32_0 : i32, i32
  }
  func.func @transform_9(%arg0: i32, %arg1: i32) -> (i32, i32, i32) {
    %c0_i32 = arith.constant 0 : i32
    %c0_i32_0 = arith.constant 0 : i32
    return %arg0, %arg1, %c0_i32 : i32, i32, i32
  }
}

</mosaic_0001>

<llo_original>
// kernel: tpu_custom_call.1
$region0: #{tpu_custom_call.1}
  #allocation0 [shape = 'u32[]', space=smem, size = 0x4, offset = 0x4, fixed_abs, tag = 'smem constant byte address 0x4 - core index']
  #allocation1 [shape = 'u32[144,128]{1,0:T(1,128)}', space=vmem, size = 0x12000, scoped, tag = 'internal scratch']
  %s0 = inlined_call_operand.hbm [shape: f32[2,4,8,8], index: 0, kind: input, shape index: {}]
  %s1 = inlined_call_operand.hbm [shape: f32[2,4,8,8], index: 1, kind: input, shape index: {}]
  %s2 = inlined_call_operand.hbm [shape: f32[2,4,8,8], index: 2, kind: input, shape index: {}]
  %s3 = inlined_call_operand.hbm [shape: s32[2,1,8,8], index: 3, kind: input, shape index: {}]
  %s4 = inlined_call_operand.vmem [shape: f32[8,8], index: 4, kind: input, shape index: {}]
  %s5 = inlined_call_operand.vmem [shape: f32[8,8], index: 5, kind: input, shape index: {}]
  %s6 = inlined_call_operand.hbm [shape: f32[8,8], index: 6, kind: input, shape index: {}]
  %s7 = inlined_call_operand.hbm [shape: f32[4,8,32], index: 7, kind: input, shape index: {}]
  %s8 = inlined_call_operand.vmem [shape: f32[1,32], index: 8, kind: input, shape index: {}]
  %s9 = inlined_call_operand.hbm [shape: f32[2,8,32], index: 9, kind: output, shape index: {}]
  %s10 = sld [smem:[#allocation0]]
  $region93: #{tpu_custom_call.1} parent=0
    _
  %s12 = ssub.s32 1, %s10
  %s13 = scalar_select 0, %s12, %s10
  $region1: #{tpu_custom_call.1} parent=0
    #allocation2 [shape = 'u8[32768]{0}', space=vmem, size = 0x8000, scoped, tag = 'input window, operand 0']
    #allocation3 [shape = 's32[2]{0}', space=sflag, size = 0x8, scoped, tag = 'scoped memory for tpu_custom_call.1']
    #allocation4 [shape = 's32[2]{0}', space=sflag, size = 0x8, scoped, tag = 'scoped memory for tpu_custom_call.1']
    #allocation5 [shape = 'u8[32768]{0}', space=vmem, size = 0x8000, scoped, tag = 'input window, operand 1']
    #allocation6 [shape = 's32[2]{0}', space=sflag, size = 0x8, scoped, tag = 'scoped memory for tpu_custom_call.1']
    #allocation7 [shape = 'u8[32768]{0}', space=vmem, size = 0x8000, scoped, tag = 'input window, operand 2']
    #allocation8 [shape = 'u8[8192]{0}', space=vmem, size = 0x2000, scoped, tag = 'input window, operand 3']
    #allocation9 [shape = 's32[2]{0}', space=sflag, size = 0x8, scoped, tag = 'scoped memory for tpu_custom_call.1']
    #allocation10 [shape = 'u8[4096]{0}', space=vmem, size = 0x1000, scoped, tag = 'input window, operand 6, single buffered']
    #allocation11 [shape = 'u8[16384]{0}', space=vmem, size = 0x4000, scoped, tag = 'input window, operand 7, single buffered']
    #allocation12 [shape = 's32[1]{0}', space=sflag, size = 0x4, scoped, tag = 'scoped memory for tpu_custom_call.1']
    #allocation13 [shape = 'u8[8192]{0}', space=vmem, size = 0x2000, scoped, tag = 'output window, operand 0']
    %14 = vsyncpa [#allocation3], 0
    %s15 = scalar_lea.sflag [#allocation3], 1
    %16 = vsyncpa %s15, 0
    %17 = vsyncpa [#allocation6], 0
    %s18 = scalar_lea.sflag [#allocation6], 1
    %19 = vsyncpa %s18, 0
    %20 = vsyncpa [#allocation9], 0
    %s21 = scalar_lea.sflag [#allocation9], 1
    %22 = vsyncpa %s21, 0
    %23 = vsyncpa [#allocation12], 0
    %24 = vsyncpa [#allocation4], 0
    %s25 = scalar_lea.sflag [#allocation4], 1
    %26 = vsyncpa %s25, 0
    loop: start=0, step=1, limit=4
    $region2: #{tpu_custom_call.1} parent=1 // loop_pre_header
      _
    $region3: #{tpu_custom_call.1} parent=1 // loop_header
      %s28 = sphi 0, %s32
      %p29 = scmp.ge.s32.totalorder %s28, 4
      %s35 = sphi 0, %s47
      %s36 = sphi 0, %s43
      %s37 = sphi 0, %s35
      %s38 = sphi 0, %s36
      %s39 = sphi 0, %s37
      %s40 = sphi 0, %s38
      %s52 = sphi 0, %s54
      %s55 = sphi 0, %s52
      %s56 = sphi 0, %s55
      %s72 = sphi 0, %s56
      %s78 = sphi 0, %s80
      %s81 = sphi 0, %s78
      %s82 = sphi 0, %s81
      %s98 = sphi 0, %s82
      %s104 = sphi 0, %s106
      %s107 = sphi 0, %s104
      %s108 = sphi 0, %s107
      %s124 = sphi 0, %s108
      %s132 = sphi 0, %s134
      %s135 = sphi 0, %s132
      %s136 = sphi 0, %s135
      %s152 = sphi 0, %s136
      %s156 = sphi 0, %s156
      %s158 = sphi 0, %s156
      %s159 = sphi 0, %s158
      %s173 = sphi 0, %s159
      %s177 = sphi 0, %s177
      %s179 = sphi 0, %s177
      %s180 = sphi 0, %s179
      %s194 = sphi 0, %s180
      %s198 = sphi 0, %s198
      %s200 = sphi 0, %s198
      %s201 = sphi 0, %s200
      %s215 = sphi 0, %s201
      %s219 = sphi 0, %s219
      %s221 = sphi 0, %s219
      %s222 = sphi 0, %s221
      %s236 = sphi 0, %s222
      %s240 = sphi 0, %s240
      %s242 = sphi 0, %s240
      %s243 = sphi 0, %s242
      %s257 = sphi 0, %s243
      %s265 = sphi 0, %s267
      %s268 = sphi 0, %s265
      %s269 = sphi 0, %s268
      %s285 = sphi 0, %s269
    $region4: #{tpu_custom_call.1} parent=1 // loop_header_branch
      %31 = sbr.rel (%p29) target = $region8
    $region5: #{tpu_custom_call.1} parent=1 // loop_body
      %s33 = ssub.s32 %s28, 1
      %s34 = ssub.s32 %s28, 2
      %s41 = sadd.s32 1, %s36
      %p42 = scmp.ge.s32.totalorder %s41, 1
      %s43 = scalar_select %p42, 0, %s41
      %s44 = sadd.s32 1, %s35
      %s45 = scalar_select %p42, %s44, %s35
      %p46 = scmp.ge.s32.totalorder %s45, 2
      %s47 = scalar_select %p46, 0, %s45
      %s48 = ssub.s32 %s35, %s47
      %s49 = ssub.s32 %s36, %s43
      %s50 = sor.u32 %s48, %s49
      %p51 = scmp.eq.s32.totalorder %s50, 0
      %s53 = sadd.s32 %s52, 1
      %s54 = scalar_select %p51, %s52, %s53
      %p57 = pneg %p51
      %p58 = scmp.eq.s32.totalorder %s28, 1
      %p59 = por %p57, %p58
      %p60 = scmp.ne.s32.totalorder %s52, %s55
      %p61 = scmp.eq.s32.totalorder %s28, 0
      %p62 = por %p60, %p61
      %p63 = scmp.ne.s32.totalorder %s52, %s55
      %p64 = scmp.eq.s32.totalorder %s33, 1
      %p65 = por %p63, %p64
      %p66 = scmp.ne.s32.totalorder %s55, %s56
      %p67 = scmp.eq.s32.totalorder %s33, 0
      %p68 = por %p66, %p67
      %p69 = scmp.ne.s32.totalorder %s55, %s56
      %p70 = scmp.eq.s32.totalorder %s34, 1
      %p71 = por %p69, %p70
      %p73 = scmp.ne.s32.totalorder %s56, %s72
      %p74 = scmp.eq.s32.totalorder %s34, 0
      %p75 = por %p73, %p74
      %s76 = ssub.s32 %s35, %s47
      %p77 = scmp.eq.s32.totalorder %s76, 0
      %s79 = sadd.s32 %s78, 1
      %s80 = scalar_select %p77, %s78, %s79
      %p83 = pneg %p77
      %p84 = scmp.eq.s32.totalorder %s28, 1
      %p85 = por %p83, %p84
      %p86 = scmp.ne.s32.totalorder %s78, %s81
      %p87 = scmp.eq.s32.totalorder %s28, 0
      %p88 = por %p86, %p87
      %p89 = scmp.ne.s32.totalorder %s78, %s81
      %p90 = scmp.eq.s32.totalorder %s33, 1
      %p91 = por %p89, %p90
      %p92 = scmp.ne.s32.totalorder %s81, %s82
      %p93 = scmp.eq.s32.totalorder %s33, 0
      %p94 = por %p92, %p93
      %p95 = scmp.ne.s32.totalorder %s81, %s82
      %p96 = scmp.eq.s32.totalorder %s34, 1
      %p97 = por %p95, %p96
      %p99 = scmp.ne.s32.totalorder %s82, %s98
      %p100 = scmp.eq.s32.totalorder %s34, 0
      %p101 = por %p99, %p100
      %s102 = ssub.s32 %s35, %s47
      %p103 = scmp.eq.s32.totalorder %s102, 0
      %s105 = sadd.s32 %s104, 1
      %s106 = scalar_select %p103, %s104, %s105
      %p109 = pneg %p103
      %p110 = scmp.eq.s32.totalorder %s28, 1
      %p111 = por %p109, %p110
      %p112 = scmp.ne.s32.totalorder %s104, %s107
      %p113 = scmp.eq.s32.totalorder %s28, 0
      %p114 = por %p112, %p113
      %p115 = scmp.ne.s32.totalorder %s104, %s107
      %p116 = scmp.eq.s32.totalorder %s33, 1
      %p117 = por %p115, %p116
      %p118 = scmp.ne.s32.totalorder %s107, %s108
      %p119 = scmp.eq.s32.totalorder %s33, 0
      %p120 = por %p118, %p119
      %p121 = scmp.ne.s32.totalorder %s107, %s108
      %p122 = scmp.eq.s32.totalorder %s34, 1
      %p123 = por %p121, %p122
      %p125 = scmp.ne.s32.totalorder %s108, %s124
      %p126 = scmp.eq.s32.totalorder %s34, 0
      %p127 = por %p125, %p126
      %s128 = ssub.s32 %s35, %s47
      %s129 = ssub.s32 %s36, %s43
      %s130 = sor.u32 %s128, %s129
      %p131 = scmp.eq.s32.totalorder %s130, 0
      %s133 = sadd.s32 %s132, 1
      %s134 = scalar_select %p131, %s132, %s133
      %p137 = pneg %p131
      %p138 = scmp.eq.s32.totalorder %s28, 1
      %p139 = por %p137, %p138
      %p140 = scmp.ne.s32.totalorder %s132, %s135
      %p141 = scmp.eq.s32.totalorder %s28, 0
      %p142 = por %p140, %p141
      %p143 = scmp.ne.s32.totalorder %s132, %s135
      %p144 = scmp.eq.s32.totalorder %s33, 1
      %p145 = por %p143, %p144
      %p146 = scmp.ne.s32.totalorder %s135, %s136
      %p147 = scmp.eq.s32.totalorder %s33, 0
      %p148 = por %p146, %p147
      %p149 = scmp.ne.s32.totalorder %s135, %s136
      %p150 = scmp.eq.s32.totalorder %s34, 1
      %p151 = por %p149, %p150
      %p153 = scmp.ne.s32.totalorder %s136, %s152
      %p154 = scmp.eq.s32.totalorder %s34, 0
      %p155 = por %p153, %p154
      %s157 = sadd.s32 %s156, 1
      %p160 = scmp.eq.s32.totalorder %s28, 1
      %p161 = scmp.ne.s32.totalorder %s156, %s158
      %p162 = scmp.eq.s32.totalorder %s28, 0
      %p163 = por %p161, %p162
      %p164 = scmp.ne.s32.totalorder %s156, %s158
      %p165 = scmp.eq.s32.totalorder %s33, 1
      %p166 = por %p164, %p165
      %p167 = scmp.ne.s32.totalorder %s158, %s159
      %p168 = scmp.eq.s32.totalorder %s33, 0
      %p169 = por %p167, %p168
      %p170 = scmp.ne.s32.totalorder %s158, %s159
      %p171 = scmp.eq.s32.totalorder %s34, 1
      %p172 = por %p170, %p171
      %p174 = scmp.ne.s32.totalorder %s159, %s173
      %p175 = scmp.eq.s32.totalorder %s34, 0
      %p176 = por %p174, %p175
      %s178 = sadd.s32 %s177, 1
      %p181 = scmp.eq.s32.totalorder %s28, 1
      %p182 = scmp.ne.s32.totalorder %s177, %s179
      %p183 = scmp.eq.s32.totalorder %s28, 0
      %p184 = por %p182, %p183
      %p185 = scmp.ne.s32.totalorder %s177, %s179
      %p186 = scmp.eq.s32.totalorder %s33, 1
      %p187 = por %p185, %p186
      %p188 = scmp.ne.s32.totalorder %s179, %s180
      %p189 = scmp.eq.s32.totalorder %s33, 0
      %p190 = por %p188, %p189
      %p191 = scmp.ne.s32.totalorder %s179, %s180
      %p192 = scmp.eq.s32.totalorder %s34, 1
      %p193 = por %p191, %p192
      %p195 = scmp.ne.s32.totalorder %s180, %s194
      %p196 = scmp.eq.s32.totalorder %s34, 0
      %p197 = por %p195, %p196
      %s199 = sadd.s32 %s198, 1
      %p202 = scmp.eq.s32.totalorder %s28, 1
      %p203 = scmp.ne.s32.totalorder %s198, %s200
      %p204 = scmp.eq.s32.totalorder %s28, 0
      %p205 = por %p203, %p204
      %p206 = scmp.ne.s32.totalorder %s198, %s200
      %p207 = scmp.eq.s32.totalorder %s33, 1
      %p208 = por %p206, %p207
      %p209 = scmp.ne.s32.totalorder %s200, %s201
      %p210 = scmp.eq.s32.totalorder %s33, 0
      %p211 = por %p209, %p210
      %p212 = scmp.ne.s32.totalorder %s200, %s201
      %p213 = scmp.eq.s32.totalorder %s34, 1
      %p214 = por %p212, %p213
      %p216 = scmp.ne.s32.totalorder %s201, %s215
      %p217 = scmp.eq.s32.totalorder %s34, 0
      %p218 = por %p216, %p217
      %s220 = sadd.s32 %s219, 1
      %p223 = scmp.eq.s32.totalorder %s28, 1
      %p224 = scmp.ne.s32.totalorder %s219, %s221
      %p225 = scmp.eq.s32.totalorder %s28, 0
      %p226 = por %p224, %p225
      %p227 = scmp.ne.s32.totalorder %s219, %s221
      %p228 = scmp.eq.s32.totalorder %s33, 1
      %p229 = por %p227, %p228
      %p230 = scmp.ne.s32.totalorder %s221, %s222
      %p231 = scmp.eq.s32.totalorder %s33, 0
      %p232 = por %p230, %p231
      %p233 = scmp.ne.s32.totalorder %s221, %s222
      %p234 = scmp.eq.s32.totalorder %s34, 1
      %p235 = por %p233, %p234
      %p237 = scmp.ne.s32.totalorder %s222, %s236
      %p238 = scmp.eq.s32.totalorder %s34, 0
      %p239 = por %p237, %p238
      %s241 = sadd.s32 %s240, 1
      %p244 = scmp.eq.s32.totalorder %s28, 1
      %p245 = scmp.ne.s32.totalorder %s240, %s242
      %p246 = scmp.eq.s32.totalorder %s28, 0
      %p247 = por %p245, %p246
      %p248 = scmp.ne.s32.totalorder %s240, %s242
      %p249 = scmp.eq.s32.totalorder %s33, 1
      %p250 = por %p248, %p249
      %p251 = scmp.ne.s32.totalorder %s242, %s243
      %p252 = scmp.eq.s32.totalorder %s33, 0
      %p253 = por %p251, %p252
      %p254 = scmp.ne.s32.totalorder %s242, %s243
      %p255 = scmp.eq.s32.totalorder %s34, 1
      %p256 = por %p254, %p255
      %p258 = scmp.ne.s32.totalorder %s243, %s257
      %p259 = scmp.eq.s32.totalorder %s34, 0
      %p260 = por %p258, %p259
      %s261 = ssub.s32 %s35, %s47
      %s262 = ssub.s32 %s36, %s43
      %s263 = sor.u32 %s261, %s262
      %p264 = scmp.eq.s32.totalorder %s263, 0
      %s266 = sadd.s32 %s265, 1
      %s267 = scalar_select %p264, %s265, %s266
      %p270 = pneg %p264
      %p271 = scmp.eq.s32.totalorder %s28, 1
      %p272 = por %p270, %p271
      %p273 = scmp.ne.s32.totalorder %s265, %s268
      %p274 = scmp.eq.s32.totalorder %s28, 0
      %p275 = por %p273, %p274
      %p276 = scmp.ne.s32.totalorder %s265, %s268
      %p277 = scmp.eq.s32.totalorder %s33, 1
      %p278 = por %p276, %p277
      %p279 = scmp.ne.s32.totalorder %s268, %s269
      %p280 = scmp.eq.s32.totalorder %s33, 0
      %p281 = por %p279, %p280
      %p282 = scmp.ne.s32.totalorder %s268, %s269
      %p283 = scmp.eq.s32.totalorder %s34, 1
      %p284 = por %p282, %p283
      %p286 = scmp.ne.s32.totalorder %s269, %s285
      %p287 = scmp.eq.s32.totalorder %s34, 0
      %p288 = por %p286, %p287
      %p289 = scmp.le.s32.totalorder 1, %s28
      %p290 = scmp.lt.s32.totalorder %s28, 3
      %p291 = pnand %p289, %p290
      %p292 = pneg %p291
      // Predicated region
      $region9: #{tpu_custom_call.1} parent=5 // pred_check
        _
      $region10: #{tpu_custom_call.1} parent=5 // pred_check_branch
        %294 = sbr.rel (%p291) target = $region12
      $region11: #{tpu_custom_call.1} parent=5 // pred_region
        %s295 = ssub.s32 %s28, 1
        // Predicated region
        $region13: #{tpu_custom_call.1} parent=11 // pred_check
          %p296 = pneg %p169
        $region14: #{tpu_custom_call.1} parent=11 // pred_check_branch
          %298 = sbr.rel (%p296) target = $region16
        $region15: #{tpu_custom_call.1} parent=11 // pred_region
          _
        $region16: #{tpu_custom_call.1} parent=11 // pred_fallthru
          _
        // Predicated region
        $region17: #{tpu_custom_call.1} parent=11 // pred_check
          %p299 = pneg %p190
        $region18: #{tpu_custom_call.1} parent=11 // pred_check_branch
          %301 = sbr.rel (%p299) target = $region20
        $region19: #{tpu_custom_call.1} parent=11 // pred_region
          _
        $region20: #{tpu_custom_call.1} parent=11 // pred_fallthru
          _
        // Predicated region
        $region21: #{tpu_custom_call.1} parent=11 // pred_check
          %p302 = pneg %p211
        $region22: #{tpu_custom_call.1} parent=11 // pred_check_branch
          %304 = sbr.rel (%p302) target = $region24
        $region23: #{tpu_custom_call.1} parent=11 // pred_region
          %s306 = ssub.s32 128, 128
          %307 = vsyncadd [#allocation9], %s306
          %s309 = sshll.u32 [#allocation10], 4
          %s310 = int_to_ptr.vmem [resolvable:$true] %s309
          %312 = dma.hbm_to_vmem [thread:$0]  %s6, 128, %s310, [#allocation9]
        $region24: #{tpu_custom_call.1} parent=11 // pred_fallthru
          _
        // Predicated region
        $region25: #{tpu_custom_call.1} parent=11 // pred_check
          %p313 = pneg %p232
        $region26: #{tpu_custom_call.1} parent=11 // pred_check_branch
          %315 = sbr.rel (%p313) target = $region28
        $region27: #{tpu_custom_call.1} parent=11 // pred_region
          %s317 = ssub.s32 512, 512
          %318 = vsyncadd [#allocation12], %s317
          %s319 = sshll.u32 [#allocation11], 4
          %s320 = int_to_ptr.vmem [resolvable:$true] %s319
          %325 = dma.hbm_to_vmem [thread:$0]  %s7, 512, %s320, [#allocation12], 128, 128, 8
        $region28: #{tpu_custom_call.1} parent=11 // pred_fallthru
          _
        // Predicated region
        $region29: #{tpu_custom_call.1} parent=11 // pred_check
          %p326 = pneg %p253
        $region30: #{tpu_custom_call.1} parent=11 // pred_check_branch
          %328 = sbr.rel (%p326) target = $region32
        $region31: #{tpu_custom_call.1} parent=11 // pred_region
          _
        $region32: #{tpu_custom_call.1} parent=11 // pred_fallthru
          _
      $region12: #{tpu_custom_call.1} parent=5 // pred_fallthru
        _
      %p329 = scmp.lt.s32.totalorder %s28, 2
      // Predicated region
      $region33: #{tpu_custom_call.1} parent=5 // pred_check
        %p330 = pneg %p329
      $region34: #{tpu_custom_call.1} parent=5 // pred_check_branch
        %332 = sbr.rel (%p330) target = $region36
      $region35: #{tpu_custom_call.1} parent=5 // pred_region
        // Predicated region
        $region37: #{tpu_custom_call.1} parent=35 // pred_check
          %p333 = pneg %p62
        $region38: #{tpu_custom_call.1} parent=35 // pred_check_branch
          %335 = sbr.rel (%p333) target = $region40
        $region39: #{tpu_custom_call.1} parent=35 // pred_region
          %s336 = sand.u32 %s52, 1
          %s337 = scalar_lea.sflag [#allocation3], %s336
          %s338 = sand.u32 %s52, 1
          %s339 = smul.addr %s338, 32
          %s340 = scalar_lea.vmem [#allocation2], %s339
          %s342 = ssub.s32 512, 512
          %343 = vsyncadd %s337, %s342
          %s344 = smul.addr %s35, 4
          %s345 = sadd.s32 %s36, %s344
          %s346 = smul.addr %s345, 128
          %s347 = scalar_lea.hbm %s0, %s346
          %s348 = sshll.u32 %s340, 4
          %s349 = int_to_ptr.vmem [resolvable:$true] %s348
          %354 = dma.hbm_to_vmem [thread:$0]  %s347, 512, %s349, %s337, 128, 128, 8
        $region40: #{tpu_custom_call.1} parent=35 // pred_fallthru
          _
        // Predicated region
        $region41: #{tpu_custom_call.1} parent=35 // pred_check
          %p355 = pneg %p88
        $region42: #{tpu_custom_call.1} parent=35 // pred_check_branch
          %357 = sbr.rel (%p355) target = $region44
        $region43: #{tpu_custom_call.1} parent=35 // pred_region
          %s358 = sand.u32 %s28, 1
          %s359 = scalar_lea.sflag [#allocation6], %s358
          %s360 = sand.u32 %s78, 1
          %s361 = smul.addr %s360, 32
          %s362 = scalar_lea.vmem [#allocation5], %s361
          %s364 = ssub.s32 512, 512
          %365 = vsyncadd %s359, %s364
          %s366 = smul.addr %s35, 4
          %s367 = smul.addr %s366, 128
          %s368 = scalar_lea.hbm %s1, %s367
          %s369 = sshll.u32 %s362, 4
          %s370 = int_to_ptr.vmem [resolvable:$true] %s369
          %375 = dma.hbm_to_vmem [thread:$0]  %s368, 512, %s370, %s359, 128, 128, 8
        $region44: #{tpu_custom_call.1} parent=35 // pred_fallthru
          _
        // Predicated region
        $region45: #{tpu_custom_call.1} parent=35 // pred_check
          %p376 = pneg %p114
        $region46: #{tpu_custom_call.1} parent=35 // pred_check_branch
          %378 = sbr.rel (%p376) target = $region48
        $region47: #{tpu_custom_call.1} parent=35 // pred_region
          %s379 = sand.u32 %s28, 1
          %s380 = scalar_lea.sflag [#allocation6], %s379
          %s381 = sand.u32 %s104, 1
          %s382 = smul.addr %s381, 32
          %s383 = scalar_lea.vmem [#allocation7], %s382
          %s385 = ssub.s32 512, 512
          %386 = vsyncadd %s380, %s385
          %s387 = smul.addr %s35, 4
          %s388 = smul.addr %s387, 128
          %s389 = scalar_lea.hbm %s2, %s388
          %s390 = sshll.u32 %s383, 4
          %s391 = int_to_ptr.vmem [resolvable:$true] %s390
          %396 = dma.hbm_to_vmem [thread:$0]  %s389, 512, %s391, %s380, 128, 128, 8
        $region48: #{tpu_custom_call.1} parent=35 // pred_fallthru
          _
        // Predicated region
        $region49: #{tpu_custom_call.1} parent=35 // pred_check
          %p397 = pneg %p142
        $region50: #{tpu_custom_call.1} parent=35 // pred_check_branch
          %399 = sbr.rel (%p397) target = $region52
        $region51: #{tpu_custom_call.1} parent=35 // pred_region
          %s400 = sand.u32 %s28, 1
          %s401 = scalar_lea.sflag [#allocation9], %s400
          %s402 = sand.u32 %s132, 1
          %s403 = smul.addr %s402, 8
          %s404 = scalar_lea.vmem [#allocation8], %s403
          %s406 = ssub.s32 128, 128
          %407 = vsyncadd %s401, %s406
          %s408 = sadd.s32 %s36, %s35
          %s409 = smul.addr %s408, 128
          %s410 = scalar_lea.hbm %s3, %s409
          %s412 = sshll.u32 %s404, 4
          %s413 = int_to_ptr.vmem [resolvable:$true] %s412
          %415 = dma.hbm_to_vmem [thread:$0]  %s410, 128, %s413, %s401
        $region52: #{tpu_custom_call.1} parent=35 // pred_fallthru
          _
      $region36: #{tpu_custom_call.1} parent=5 // pred_fallthru
        _
      %p416 = scmp.le.s32.totalorder 1, %s28
      %p417 = scmp.lt.s32.totalorder %s28, 3
      %p418 = pnand %p416, %p417
      %p419 = pneg %p418
      // Predicated region
      $region53: #{tpu_custom_call.1} parent=5 // pred_check
        _
      $region54: #{tpu_custom_call.1} parent=5 // pred_check_branch
        %421 = sbr.rel (%p418) target = $region56
      $region55: #{tpu_custom_call.1} parent=5 // pred_region
        %s422 = ssub.s32 %s28, 1
        %s423 = sand.u32 %s55, 1
        %s424 = scalar_lea.sflag [#allocation3], %s423
        %s425 = sand.u32 %s55, 1
        %s426 = smul.addr %s425, 32
        %s427 = scalar_lea.vmem [#allocation2], %s426
        // Predicated region
        $region57: #{tpu_custom_call.1} parent=55 // pred_check
          %p428 = pneg %p68
        $region58: #{tpu_custom_call.1} parent=55 // pred_check_branch
          %430 = sbr.rel (%p428) target = $region60
        $region59: #{tpu_custom_call.1} parent=55 // pred_region
          %431 = dma.done %s424, 512
        $region60: #{tpu_custom_call.1} parent=55 // pred_fallthru
          _
        %s432 = sand.u32 %s33, 1
        %s433 = scalar_lea.sflag [#allocation6], %s432
        %s434 = sand.u32 %s81, 1
        %s435 = smul.addr %s434, 32
        %s436 = scalar_lea.vmem [#allocation5], %s435
        // Predicated region
        $region61: #{tpu_custom_call.1} parent=55 // pred_check
          %p437 = pneg %p94
        $region62: #{tpu_custom_call.1} parent=55 // pred_check_branch
          %439 = sbr.rel (%p437) target = $region64
        $region63: #{tpu_custom_call.1} parent=55 // pred_region
          %440 = dma.done %s433, 512
        $region64: #{tpu_custom_call.1} parent=55 // pred_fallthru
          _
        %s441 = sand.u32 %s33, 1
        %s442 = scalar_lea.sflag [#allocation6], %s441
        %s443 = sand.u32 %s107, 1
        %s444 = smul.addr %s443, 32
        %s445 = scalar_lea.vmem [#allocation7], %s444
        // Predicated region
        $region65: #{tpu_custom_call.1} parent=55 // pred_check
          %p446 = pneg %p120
        $region66: #{tpu_custom_call.1} parent=55 // pred_check_branch
          %448 = sbr.rel (%p446) target = $region68
        $region67: #{tpu_custom_call.1} parent=55 // pred_region
          %449 = dma.done %s442, 512
        $region68: #{tpu_custom_call.1} parent=55 // pred_fallthru
          _
        %s450 = sand.u32 %s33, 1
        %s451 = scalar_lea.sflag [#allocation9], %s450
        %s452 = sand.u32 %s135, 1
        %s453 = smul.addr %s452, 8
        %s454 = scalar_lea.vmem [#allocation8], %s453
        // Predicated region
        $region69: #{tpu_custom_call.1} parent=55 // pred_check
          %p455 = pneg %p148
        $region70: #{tpu_custom_call.1} parent=55 // pred_check_branch
          %457 = sbr.rel (%p455) target = $region72
        $region71: #{tpu_custom_call.1} parent=55 // pred_region
          %458 = dma.done %s451, 128
        $region72: #{tpu_custom_call.1} parent=55 // pred_fallthru
          _
        // Predicated region
        $region73: #{tpu_custom_call.1} parent=55 // pred_check
          %p459 = pneg %p211
        $region74: #{tpu_custom_call.1} parent=55 // pred_check_branch
          %461 = sbr.rel (%p459) target = $region76
        $region75: #{tpu_custom_call.1} parent=55 // pred_region
          %462 = dma.done [#allocation9], 128
        $region76: #{tpu_custom_call.1} parent=55 // pred_fallthru
          _
        // Predicated region
        $region77: #{tpu_custom_call.1} parent=55 // pred_check
          %p463 = pneg %p232
        $region78: #{tpu_custom_call.1} parent=55 // pred_check_branch
          %465 = sbr.rel (%p463) target = $region80
        $region79: #{tpu_custom_call.1} parent=55 // pred_region
          %466 = dma.done [#allocation12], 512
        $region80: #{tpu_custom_call.1} parent=55 // pred_fallthru
          _
        %s467 = sand.u32 %s55, 1
        %s468 = scalar_lea.sflag [#allocation3], %s467
        %s469 = sand.u32 %s55, 1
        %s470 = smul.addr %s469, 32
        %s471 = scalar_lea.vmem [#allocation2], %s470
        %p472 = pneg %p68
        %p473 = pneg %p65
        %s474 = sand.u32 %s33, 1
        %s475 = scalar_lea.sflag [#allocation6], %s474
        %s476 = sand.u32 %s81, 1
        %s477 = smul.addr %s476, 32
        %s478 = scalar_lea.vmem [#allocation5], %s477
        %p479 = pneg %p94
        %p480 = pneg %p91
        %s481 = sand.u32 %s33, 1
        %s482 = scalar_lea.sflag [#allocation6], %s481
        %s483 = sand.u32 %s107, 1
        %s484 = smul.addr %s483, 32
        %s485 = scalar_lea.vmem [#allocation7], %s484
        %p486 = pneg %p120
        %p487 = pneg %p117
        %s488 = sand.u32 %s33, 1
        %s489 = scalar_lea.sflag [#allocation9], %s488
        %s490 = sand.u32 %s135, 1
        %s491 = smul.addr %s490, 8
        %s492 = scalar_lea.vmem [#allocation8], %s491
        %p493 = pneg %p148
        %p494 = pneg %p145
        %p495 = pneg %p169
        %p496 = pneg %p166
        %p497 = pneg %p190
        %p498 = pneg %p187
        %p499 = pneg %p211
        %p500 = pneg %p208
        %p501 = pneg %p232
        %p502 = pneg %p229
        %p503 = pneg %p253
        %p504 = pneg %p250
        %p505 = pneg %p281
        %p506 = pneg %p278
        %s507 = sand.u32 %s268, 1
        %s508 = scalar_lea.sflag [#allocation4], %s507
        %s509 = sand.u32 %s268, 1
        %s510 = smul.addr %s509, 8
        %s511 = scalar_lea.vmem [#allocation13], %s510
        %v512 = vld [vmem:[%s427] sm:$0xff]
        %v513 = vld [vmem:[%s427 + $0x8] sm:$0xff]
        %v514 = vld [vmem:[%s427 + $0x10] sm:$0xff]
        %v515 = vld [vmem:[%s427 + $0x18] sm:$0xff]
        %v516 = vld [vmem:[%s4] sm:$0xff]
        %vm517 = vcmask 64512
        %v519 = vsel %vm517, %v512, 0
        %v522 = vsel %vm517, %v513, 0
        %v525 = vsel %vm517, %v514, 0
        %v528 = vsel %vm517, %v515, 0
        %530 = vmatprep.subr.mxu0 0.0
        %531 = vmatpush1.msra.mxu0 %v516
        %532 = vmatprep.subr.mxu0 0.0
        %533 = vmatpush1.msra.mxu0 0.0
        %534 = vmatprep.subr.mxu0 0.0
        %535 = vmatpush1.msra.mxu0 0.0
        %536 = vmatprep.subr.mxu0 0.0
        %537 = vmatpush1.msra.mxu0 0.0
        %538 = vmatprep.subr.mxu0 0.0
        %539 = vmatpush1.msra.mxu0 0.0
        %540 = vmatprep.subr.mxu0 0.0
        %541 = vmatpush1.msra.mxu0 0.0
        %542 = vmatprep.subr.mxu0 0.0
        %543 = vmatpush1.msra.mxu0 0.0
        %544 = vmatprep.subr.mxu0 0.0
        %545 = vmatpush1.msra.mxu0 0.0
        %546 = vmatprep.subr.mxu0 0.0
        %547 = vmatpush1.msra.mxu0 0.0
        %548 = vmatprep.subr.mxu0 0.0
        %549 = vmatpush1.msra.mxu0 0.0
        %550 = vmatprep.subr.mxu0 0.0
        %551 = vmatpush1.msra.mxu0 0.0
        %552 = vmatprep.subr.mxu0 0.0
        %553 = vmatpush1.msra.mxu0 0.0
        %554 = vmatprep.subr.mxu0 0.0
        %555 = vmatpush1.msra.mxu0 0.0
        %556 = vmatprep.subr.mxu0 0.0
        %557 = vmatpush1.msra.mxu0 0.0
        %558 = vmatprep.subr.mxu0 0.0
        %559 = vmatpush1.msra.mxu0 0.0
        %560 = vmatprep.subr.mxu0 0.0
        %561 = vmatpush1.msra.mxu0 0.0
        %562 = vmatprep.subr.mxu0 0.0
        %563 = vmatpush1.msra.mxu0 0.0
        %564 = vmatprep.subr.mxu0 0.0
        %565 = vmatpush1.msra.mxu0 0.0
        %566 = vmatprep.subr.mxu0 0.0
        %567 = vmatpush1.msra.mxu0 0.0
        %568 = vmatprep.subr.mxu0 0.0
        %569 = vmatpush1.msra.mxu0 0.0
        %570 = vmatprep.subr.mxu0 0.0
        %571 = vmatpush1.msra.mxu0 0.0
        %572 = vmatprep.subr.mxu0 0.0
        %573 = vmatpush1.msra.mxu0 0.0
        %574 = vmatprep.subr.mxu0 0.0
        %575 = vmatpush1.msra.mxu0 0.0
        %576 = vmatprep.subr.mxu0 0.0
        %577 = vmatpush1.msra.mxu0 0.0
        %578 = vmatprep.subr.mxu0 0.0
        %579 = vmatpush1.msra.mxu0 0.0
        %580 = vmatprep.subr.mxu0 0.0
        %581 = vmatpush1.msra.mxu0 0.0
        %582 = vmatprep.subr.mxu0 0.0
        %583 = vmatpush1.msra.mxu0 0.0
        %584 = vmatprep.subr.mxu0 0.0
        %585 = vmatpush1.msra.mxu0 0.0
        %586 = vmatprep.subr.mxu0 0.0
        %587 = vmatpush1.msra.mxu0 0.0
        %588 = vmatprep.subr.mxu0 0.0
        %589 = vmatpush1.msra.mxu0 0.0
        %590 = vmatprep.subr.mxu0 0.0
        %591 = vmatpush1.msra.mxu0 0.0
        %592 = vmatprep.subr.mxu0 0.0
        %593 = vmatpush1.msra.mxu0 0.0
        %594 = vmatprep.mubr.f32.mxu0 0.0
        %595 = vmatmul.mubr.f32.gmra.mrb[0].mxu0 %v519
        %v596 = vpop.f32.mrb[0].mxu0
        %v597 = vadd.f32 0.0, %v596
        %v598 = vpop.f32.mrb[0].mxu0
        %599 = vmatprep.mubr.f32.mxu0 0.0
        %600 = vmatmul.mubr.f32.gmra.mrb[0].mxu0 %v522
        %v601 = vpop.f32.mrb[0].mxu0
        %v602 = vadd.f32 0.0, %v601
        %v603 = vpop.f32.mrb[0].mxu0
        %604 = vmatprep.mubr.f32.mxu0 0.0
        %605 = vmatmul.mubr.f32.gmra.mrb[0].mxu0 %v525
        %v606 = vpop.f32.mrb[0].mxu0
        %v607 = vadd.f32 0.0, %v606
        %v608 = vpop.f32.mrb[0].mxu0
        %609 = vmatprep.mubr.f32.mxu0 0.0
        %610 = vmatmul.mubr.f32.gmra.mrb[0].mxu0 %v528
        %v611 = vpop.f32.mrb[0].mxu0
        %v612 = vadd.f32 0.0, %v611
        %v613 = vpop.f32.mrb[0].mxu0
        %614 = vdwg.mxu0
        %v615 = vld [vmem:[%s436] sm:$0xff]
        %v616 = vld [vmem:[%s436 + $0x8] sm:$0xff]
        %v617 = vld [vmem:[%s436 + $0x10] sm:$0xff]
        %v618 = vld [vmem:[%s436 + $0x18] sm:$0xff]
        %v619 = vld [vmem:[%s5] sm:$0xff]
        %v621 = vsel %vm517, %v615, 0
        %v624 = vsel %vm517, %v616, 0
        %v627 = vsel %vm517, %v617, 0
        %v630 = vsel %vm517, %v618, 0
        %632 = vmatprep.subr.mxu0 0.0
        %633 = vmatpush1.msra.mxu0 %v619
        %634 = vmatprep.subr.mxu0 0.0
        %635 = vmatpush1.msra.mxu0 0.0
        %636 = vmatprep.subr.mxu0 0.0
        %637 = vmatpush1.msra.mxu0 0.0
        %638 = vmatprep.subr.mxu0 0.0
        %639 = vmatpush1.msra.mxu0 0.0
        %640 = vmatprep.subr.mxu0 0.0
        %641 = vmatpush1.msra.mxu0 0.0
        %642 = vmatprep.subr.mxu0 0.0
        %643 = vmatpush1.msra.mxu0 0.0
        %644 = vmatprep.subr.mxu0 0.0
        %645 = vmatpush1.msra.mxu0 0.0
        %646 = vmatprep.subr.mxu0 0.0
        %647 = vmatpush1.msra.mxu0 0.0
        %648 = vmatprep.subr.mxu0 0.0
        %649 = vmatpush1.msra.mxu0 0.0
        %650 = vmatprep.subr.mxu0 0.0
        %651 = vmatpush1.msra.mxu0 0.0
        %652 = vmatprep.subr.mxu0 0.0
        %653 = vmatpush1.msra.mxu0 0.0
        %654 = vmatprep.subr.mxu0 0.0
        %655 = vmatpush1.msra.mxu0 0.0
        %656 = vmatprep.subr.mxu0 0.0
        %657 = vmatpush1.msra.mxu0 0.0
        %658 = vmatprep.subr.mxu0 0.0
        %659 = vmatpush1.msra.mxu0 0.0
        %660 = vmatprep.subr.mxu0 0.0
        %661 = vmatpush1.msra.mxu0 0.0
        %662 = vmatprep.subr.mxu0 0.0
        %663 = vmatpush1.msra.mxu0 0.0
        %664 = vmatprep.subr.mxu0 0.0
        %665 = vmatpush1.msra.mxu0 0.0
        %666 = vmatprep.subr.mxu0 0.0
        %667 = vmatpush1.msra.mxu0 0.0
        %668 = vmatprep.subr.mxu0 0.0
        %669 = vmatpush1.msra.mxu0 0.0
        %670 = vmatprep.subr.mxu0 0.0
        %671 = vmatpush1.msra.mxu0 0.0
        %672 = vmatprep.subr.mxu0 0.0
        %673 = vmatpush1.msra.mxu0 0.0
        %674 = vmatprep.subr.mxu0 0.0
        %675 = vmatpush1.msra.mxu0 0.0
        %676 = vmatprep.subr.mxu0 0.0
        %677 = vmatpush1.msra.mxu0 0.0
        %678 = vmatprep.subr.mxu0 0.0
        %679 = vmatpush1.msra.mxu0 0.0
        %680 = vmatprep.subr.mxu0 0.0
        %681 = vmatpush1.msra.mxu0 0.0
        %682 = vmatprep.subr.mxu0 0.0
        %683 = vmatpush1.msra.mxu0 0.0
        %684 = vmatprep.subr.mxu0 0.0
        %685 = vmatpush1.msra.mxu0 0.0
        %686 = vmatprep.subr.mxu0 0.0
        %687 = vmatpush1.msra.mxu0 0.0
        %688 = vmatprep.subr.mxu0 0.0
        %689 = vmatpush1.msra.mxu0 0.0
        %690 = vmatprep.subr.mxu0 0.0
        %691 = vmatpush1.msra.mxu0 0.0
        %692 = vmatprep.subr.mxu0 0.0
        %693 = vmatpush1.msra.mxu0 0.0
        %694 = vmatprep.subr.mxu0 0.0
        %695 = vmatpush1.msra.mxu0 0.0
        %696 = vmatprep.mubr.f32.mxu0 0.0
        %697 = vmatmul.mubr.f32.gmra.mrb[0].mxu0 %v621
        %v698 = vpop.f32.mrb[0].mxu0
        %v699 = vadd.f32 0.0, %v698
        %v700 = vpop.f32.mrb[0].mxu0
        %701 = vmatprep.mubr.f32.mxu0 0.0
        %702 = vmatmul.mubr.f32.gmra.mrb[0].mxu0 %v624
        %v703 = vpop.f32.mrb[0].mxu0
        %v704 = vadd.f32 0.0, %v703
        %v705 = vpop.f32.mrb[0].mxu0
        %706 = vmatprep.mubr.f32.mxu0 0.0
        %707 = vmatmul.mubr.f32.gmra.mrb[0].mxu0 %v627
        %v708 = vpop.f32.mrb[0].mxu0
        %v709 = vadd.f32 0.0, %v708
        %v710 = vpop.f32.mrb[0].mxu0
        %711 = vmatprep.mubr.f32.mxu0 0.0
        %712 = vmatmul.mubr.f32.gmra.mrb[0].mxu0 %v630
        %v713 = vpop.f32.mrb[0].mxu0
        %v714 = vadd.f32 0.0, %v713
        %v715 = vpop.f32.mrb[0].mxu0
        %716 = vdwg.mxu0
        %v717 = vld [vmem:[%s445] sm:$0xff]
        %v718 = vld [vmem:[%s445 + $0x8] sm:$0xff]
        %v719 = vld [vmem:[%s445 + $0x10] sm:$0xff]
        %v720 = vld [vmem:[%s445 + $0x18] sm:$0xff]
        %v721 = vld [vmem:[#allocation10] sm:$0xff]
        %v723 = vsel %vm517, %v717, 0
        %v726 = vsel %vm517, %v718, 0
        %v729 = vsel %vm517, %v719, 0
        %v732 = vsel %vm517, %v720, 0
        %734 = vmatprep.subr.mxu0 0.0
        %735 = vmatpush1.msra.mxu0 %v721
        %736 = vmatprep.subr.mxu0 0.0
        %737 = vmatpush1.msra.mxu0 0.0
        %738 = vmatprep.subr.mxu0 0.0
        %739 = vmatpush1.msra.mxu0 0.0
        %740 = vmatprep.subr.mxu0 0.0
        %741 = vmatpush1.msra.mxu0 0.0
        %742 = vmatprep.subr.mxu0 0.0
        %743 = vmatpush1.msra.mxu0 0.0
        %744 = vmatprep.subr.mxu0 0.0
        %745 = vmatpush1.msra.mxu0 0.0
        %746 = vmatprep.subr.mxu0 0.0
        %747 = vmatpush1.msra.mxu0 0.0
        %748 = vmatprep.subr.mxu0 0.0
        %749 = vmatpush1.msra.mxu0 0.0
        %750 = vmatprep.subr.mxu0 0.0
        %751 = vmatpush1.msra.mxu0 0.0
        %752 = vmatprep.subr.mxu0 0.0
        %753 = vmatpush1.msra.mxu0 0.0
        %754 = vmatprep.subr.mxu0 0.0
        %755 = vmatpush1.msra.mxu0 0.0
        %756 = vmatprep.subr.mxu0 0.0
        %757 = vmatpush1.msra.mxu0 0.0
        %758 = vmatprep.subr.mxu0 0.0
        %759 = vmatpush1.msra.mxu0 0.0
        %760 = vmatprep.subr.mxu0 0.0
        %761 = vmatpush1.msra.mxu0 0.0
        %762 = vmatprep.subr.mxu0 0.0
        %763 = vmatpush1.msra.mxu0 0.0
        %764 = vmatprep.subr.mxu0 0.0
        %765 = vmatpush1.msra.mxu0 0.0
        %766 = vmatprep.subr.mxu0 0.0
        %767 = vmatpush1.msra.mxu0 0.0
        %768 = vmatprep.subr.mxu0 0.0
        %769 = vmatpush1.msra.mxu0 0.0
        %770 = vmatprep.subr.mxu0 0.0
        %771 = vmatpush1.msra.mxu0 0.0
        %772 = vmatprep.subr.mxu0 0.0
        %773 = vmatpush1.msra.mxu0 0.0
        %774 = vmatprep.subr.mxu0 0.0
        %775 = vmatpush1.msra.mxu0 0.0
        %776 = vmatprep.subr.mxu0 0.0
        %777 = vmatpush1.msra.mxu0 0.0
        %778 = vmatprep.subr.mxu0 0.0
        %779 = vmatpush1.msra.mxu0 0.0
        %780 = vmatprep.subr.mxu0 0.0
        %781 = vmatpush1.msra.mxu0 0.0
        %782 = vmatprep.subr.mxu0 0.0
        %783 = vmatpush1.msra.mxu0 0.0
        %784 = vmatprep.subr.mxu0 0.0
        %785 = vmatpush1.msra.mxu0 0.0
        %786 = vmatprep.subr.mxu0 0.0
        %787 = vmatpush1.msra.mxu0 0.0
        %788 = vmatprep.subr.mxu0 0.0
        %789 = vmatpush1.msra.mxu0 0.0
        %790 = vmatprep.subr.mxu0 0.0
        %791 = vmatpush1.msra.mxu0 0.0
        %792 = vmatprep.subr.mxu0 0.0
        %793 = vmatpush1.msra.mxu0 0.0
        %794 = vmatprep.subr.mxu0 0.0
        %795 = vmatpush1.msra.mxu0 0.0
        %796 = vmatprep.subr.mxu0 0.0
        %797 = vmatpush1.msra.mxu0 0.0
        %798 = vmatprep.mubr.f32.mxu0 0.0
        %799 = vmatmul.mubr.f32.gmra.mrb[0].mxu0 %v723
        %v800 = vpop.f32.mrb[0].mxu0
        %v801 = vadd.f32 0.0, %v800
        %v802 = vpop.f32.mrb[0].mxu0
        %803 = vmatprep.mubr.f32.mxu0 0.0
        %804 = vmatmul.mubr.f32.gmra.mrb[0].mxu0 %v726
        %v805 = vpop.f32.mrb[0].mxu0
        %v806 = vadd.f32 0.0, %v805
        %v807 = vpop.f32.mrb[0].mxu0
        %808 = vmatprep.mubr.f32.mxu0 0.0
        %809 = vmatmul.mubr.f32.gmra.mrb[0].mxu0 %v729
        %v810 = vpop.f32.mrb[0].mxu0
        %v811 = vadd.f32 0.0, %v810
        %v812 = vpop.f32.mrb[0].mxu0
        %813 = vmatprep.mubr.f32.mxu0 0.0
        %814 = vmatmul.mubr.f32.gmra.mrb[0].mxu0 %v732
        %v815 = vpop.f32.mrb[0].mxu0
        %v816 = vadd.f32 0.0, %v815
        %v817 = vpop.f32.mrb[0].mxu0
        %818 = vdwg.mxu0
        %v820 = vsel %vm517, %v597, 0
        %v823 = vsel %vm517, %v699, 0
        %825 = vmatprep.subr.mxu0 0.0
        %826 = vmatpush1.xpose.msra.mxu0 %v823
        %827 = vmatprep.subr.mxu0 0.0
        %828 = vmatpush1.xpose.msra.mxu0 0.0
        %829 = vmatprep.subr.mxu0 0.0
        %830 = vmatpush1.xpose.msra.mxu0 0.0
        %831 = vmatprep.subr.mxu0 0.0
        %832 = vmatpush1.xpose.msra.mxu0 0.0
        %833 = vmatprep.subr.mxu0 0.0
        %834 = vmatpush1.xpose.msra.mxu0 0.0
        %835 = vmatprep.subr.mxu0 0.0
        %836 = vmatpush1.xpose.msra.mxu0 0.0
        %837 = vmatprep.subr.mxu0 0.0
        %838 = vmatpush1.xpose.msra.mxu0 0.0
        %839 = vmatprep.subr.mxu0 0.0
        %840 = vmatpush1.xpose.msra.mxu0 0.0
        %841 = vmatprep.subr.mxu0 0.0
        %842 = vmatpush1.xpose.msra.mxu0 0.0
        %843 = vmatprep.subr.mxu0 0.0
        %844 = vmatpush1.xpose.msra.mxu0 0.0
        %845 = vmatprep.subr.mxu0 0.0
        %846 = vmatpush1.xpose.msra.mxu0 0.0
        %847 = vmatprep.subr.mxu0 0.0
        %848 = vmatpush1.xpose.msra.mxu0 0.0
        %849 = vmatprep.subr.mxu0 0.0
        %850 = vmatpush1.xpose.msra.mxu0 0.0
        %851 = vmatprep.subr.mxu0 0.0
        %852 = vmatpush1.xpose.msra.mxu0 0.0
        %853 = vmatprep.subr.mxu0 0.0
        %854 = vmatpush1.xpose.msra.mxu0 0.0
        %855 = vmatprep.subr.mxu0 0.0
        %856 = vmatpush1.xpose.msra.mxu0 0.0
        %857 = vmatprep.subr.mxu0 0.0
        %858 = vmatpush1.xpose.msra.mxu0 0.0
        %859 = vmatprep.subr.mxu0 0.0
        %860 = vmatpush1.xpose.msra.mxu0 0.0
        %861 = vmatprep.subr.mxu0 0.0
        %862 = vmatpush1.xpose.msra.mxu0 0.0
        %863 = vmatprep.subr.mxu0 0.0
        %864 = vmatpush1.xpose.msra.mxu0 0.0
        %865 = vmatprep.subr.mxu0 0.0
        %866 = vmatpush1.xpose.msra.mxu0 0.0
        %867 = vmatprep.subr.mxu0 0.0
        %868 = vmatpush1.xpose.msra.mxu0 0.0
        %869 = vmatprep.subr.mxu0 0.0
        %870 = vmatpush1.xpose.msra.mxu0 0.0
        %871 = vmatprep.subr.mxu0 0.0
        %872 = vmatpush1.xpose.msra.mxu0 0.0
        %873 = vmatprep.subr.mxu0 0.0
        %874 = vmatpush1.xpose.msra.mxu0 0.0
        %875 = vmatprep.subr.mxu0 0.0
        %876 = vmatpush1.xpose.msra.mxu0 0.0
        %877 = vmatprep.subr.mxu0 0.0
        %878 = vmatpush1.xpose.msra.mxu0 0.0
        %879 = vmatprep.subr.mxu0 0.0
        %880 = vmatpush1.xpose.msra.mxu0 0.0
        %881 = vmatprep.subr.mxu0 0.0
        %882 = vmatpush1.xpose.msra.mxu0 0.0
        %883 = vmatprep.subr.mxu0 0.0
        %884 = vmatpush1.xpose.msra.mxu0 0.0
        %885 = vmatprep.subr.mxu0 0.0
        %886 = vmatpush1.xpose.msra.mxu0 0.0
        %887 = vmatprep.subr.mxu0 0.0
        %888 = vmatpush1.xpose.msra.mxu0 0.0
        %889 = vmatprep.mubr.f32.mxu0 0.0
        %890 = vmatmul.mubr.f32.gmra.mrb[0].mxu0 %v820
        %v891 = vpop.f32.mrb[0].mxu0
        %v892 = vadd.f32 0.0, %v891
        %v893 = vpop.f32.mrb[0].mxu0
        %894 = vdwg.mxu0
        %v896 = vsel %vm517, %v602, 0
        %v899 = vsel %vm517, %v704, 0
        %901 = vmatprep.subr.mxu0 0.0
        %902 = vmatpush1.xpose.msra.mxu0 %v899
        %903 = vmatprep.subr.mxu0 0.0
        %904 = vmatpush1.xpose.msra.mxu0 0.0
        %905 = vmatprep.subr.mxu0 0.0
        %906 = vmatpush1.xpose.msra.mxu0 0.0
        %907 = vmatprep.subr.mxu0 0.0
        %908 = vmatpush1.xpose.msra.mxu0 0.0
        %909 = vmatprep.subr.mxu0 0.0
        %910 = vmatpush1.xpose.msra.mxu0 0.0
        %911 = vmatprep.subr.mxu0 0.0
        %912 = vmatpush1.xpose.msra.mxu0 0.0
        %913 = vmatprep.subr.mxu0 0.0
        %914 = vmatpush1.xpose.msra.mxu0 0.0
        %915 = vmatprep.subr.mxu0 0.0
        %916 = vmatpush1.xpose.msra.mxu0 0.0
        %917 = vmatprep.subr.mxu0 0.0
        %918 = vmatpush1.xpose.msra.mxu0 0.0
        %919 = vmatprep.subr.mxu0 0.0
        %920 = vmatpush1.xpose.msra.mxu0 0.0
        %921 = vmatprep.subr.mxu0 0.0
        %922 = vmatpush1.xpose.msra.mxu0 0.0
        %923 = vmatprep.subr.mxu0 0.0
        %924 = vmatpush1.xpose.msra.mxu0 0.0
        %925 = vmatprep.subr.mxu0 0.0
        %926 = vmatpush1.xpose.msra.mxu0 0.0
        %927 = vmatprep.subr.mxu0 0.0
        %928 = vmatpush1.xpose.msra.mxu0 0.0
        %929 = vmatprep.subr.mxu0 0.0
        %930 = vmatpush1.xpose.msra.mxu0 0.0
        %931 = vmatprep.subr.mxu0 0.0
        %932 = vmatpush1.xpose.msra.mxu0 0.0
        %933 = vmatprep.subr.mxu0 0.0
        %934 = vmatpush1.xpose.msra.mxu0 0.0
        %935 = vmatprep.subr.mxu0 0.0
        %936 = vmatpush1.xpose.msra.mxu0 0.0
        %937 = vmatprep.subr.mxu0 0.0
        %938 = vmatpush1.xpose.msra.mxu0 0.0
        %939 = vmatprep.subr.mxu0 0.0
        %940 = vmatpush1.xpose.msra.mxu0 0.0
        %941 = vmatprep.subr.mxu0 0.0
        %942 = vmatpush1.xpose.msra.mxu0 0.0
        %943 = vmatprep.subr.mxu0 0.0
        %944 = vmatpush1.xpose.msra.mxu0 0.0
        %945 = vmatprep.subr.mxu0 0.0
        %946 = vmatpush1.xpose.msra.mxu0 0.0
        %947 = vmatprep.subr.mxu0 0.0
        %948 = vmatpush1.xpose.msra.mxu0 0.0
        %949 = vmatprep.subr.mxu0 0.0
        %950 = vmatpush1.xpose.msra.mxu0 0.0
        %951 = vmatprep.subr.mxu0 0.0
        %952 = vmatpush1.xpose.msra.mxu0 0.0
        %953 = vmatprep.subr.mxu0 0.0
        %954 = vmatpush1.xpose.msra.mxu0 0.0
        %955 = vmatprep.subr.mxu0 0.0
        %956 = vmatpush1.xpose.msra.mxu0 0.0
        %957 = vmatprep.subr.mxu0 0.0
        %958 = vmatpush1.xpose.msra.mxu0 0.0
        %959 = vmatprep.subr.mxu0 0.0
        %960 = vmatpush1.xpose.msra.mxu0 0.0
        %961 = vmatprep.subr.mxu0 0.0
        %962 = vmatpush1.xpose.msra.mxu0 0.0
        %963 = vmatprep.subr.mxu0 0.0
        %964 = vmatpush1.xpose.msra.mxu0 0.0
        %965 = vmatprep.mubr.f32.mxu0 0.0
        %966 = vmatmul.mubr.f32.gmra.mrb[0].mxu0 %v896
        %v967 = vpop.f32.mrb[0].mxu0
        %v968 = vadd.f32 0.0, %v967
        %v969 = vpop.f32.mrb[0].mxu0
        %970 = vdwg.mxu0
        %v972 = vsel %vm517, %v607, 0
        %v975 = vsel %vm517, %v709, 0
        %977 = vmatprep.subr.mxu0 0.0
        %978 = vmatpush1.xpose.msra.mxu0 %v975
        %979 = vmatprep.subr.mxu0 0.0
        %980 = vmatpush1.xpose.msra.mxu0 0.0
        %981 = vmatprep.subr.mxu0 0.0
        %982 = vmatpush1.xpose.msra.mxu0 0.0
        %983 = vmatprep.subr.mxu0 0.0
        %984 = vmatpush1.xpose.msra.mxu0 0.0
        %985 = vmatprep.subr.mxu0 0.0
        %986 = vmatpush1.xpose.msra.mxu0 0.0
        %987 = vmatprep.subr.mxu0 0.0
        %988 = vmatpush1.xpose.msra.mxu0 0.0
        %989 = vmatprep.subr.mxu0 0.0
        %990 = vmatpush1.xpose.msra.mxu0 0.0
        %991 = vmatprep.subr.mxu0 0.0
        %992 = vmatpush1.xpose.msra.mxu0 0.0
        %993 = vmatprep.subr.mxu0 0.0
        %994 = vmatpush1.xpose.msra.mxu0 0.0
        %995 = vmatprep.subr.mxu0 0.0
        %996 = vmatpush1.xpose.msra.mxu0 0.0
        %997 = vmatprep.subr.mxu0 0.0
        %998 = vmatpush1.xpose.msra.mxu0 0.0
        %999 = vmatprep.subr.mxu0 0.0
        %1000 = vmatpush1.xpose.msra.mxu0 0.0
        %1001 = vmatprep.subr.mxu0 0.0
        %1002 = vmatpush1.xpose.msra.mxu0 0.0
        %1003 = vmatprep.subr.mxu0 0.0
        %1004 = vmatpush1.xpose.msra.mxu0 0.0
        %1005 = vmatprep.subr.mxu0 0.0
        %1006 = vmatpush1.xpose.msra.mxu0 0.0
        %1007 = vmatprep.subr.mxu0 0.0
        %1008 = vmatpush1.xpose.msra.mxu0 0.0
        %1009 = vmatprep.subr.mxu0 0.0
        %1010 = vmatpush1.xpose.msra.mxu0 0.0
        %1011 = vmatprep.subr.mxu0 0.0
        %1012 = vmatpush1.xpose.msra.mxu0 0.0
        %1013 = vmatprep.subr.mxu0 0.0
        %1014 = vmatpush1.xpose.msra.mxu0 0.0
        %1015 = vmatprep.subr.mxu0 0.0
        %1016 = vmatpush1.xpose.msra.mxu0 0.0
        %1017 = vmatprep.subr.mxu0 0.0
        %1018 = vmatpush1.xpose.msra.mxu0 0.0
        %1019 = vmatprep.subr.mxu0 0.0
        %1020 = vmatpush1.xpose.msra.mxu0 0.0
        %1021 = vmatprep.subr.mxu0 0.0
        %1022 = vmatpush1.xpose.msra.mxu0 0.0
        %1023 = vmatprep.subr.mxu0 0.0
        %1024 = vmatpush1.xpose.msra.mxu0 0.0
        %1025 = vmatprep.subr.mxu0 0.0
        %1026 = vmatpush1.xpose.msra.mxu0 0.0
        %1027 = vmatprep.subr.mxu0 0.0
        %1028 = vmatpush1.xpose.msra.mxu0 0.0
        %1029 = vmatprep.subr.mxu0 0.0
        %1030 = vmatpush1.xpose.msra.mxu0 0.0
        %1031 = vmatprep.subr.mxu0 0.0
        %1032 = vmatpush1.xpose.msra.mxu0 0.0
        %1033 = vmatprep.subr.mxu0 0.0
        %1034 = vmatpush1.xpose.msra.mxu0 0.0
        %1035 = vmatprep.subr.mxu0 0.0
        %1036 = vmatpush1.xpose.msra.mxu0 0.0
        %1037 = vmatprep.subr.mxu0 0.0
        %1038 = vmatpush1.xpose.msra.mxu0 0.0
        %1039 = vmatprep.subr.mxu0 0.0
        %1040 = vmatpush1.xpose.msra.mxu0 0.0
        %1041 = vmatprep.mubr.f32.mxu0 0.0
        %1042 = vmatmul.mubr.f32.gmra.mrb[0].mxu0 %v972
        %v1043 = vpop.f32.mrb[0].mxu0
        %v1044 = vadd.f32 0.0, %v1043
        %v1045 = vpop.f32.mrb[0].mxu0
        %1046 = vdwg.mxu0
        %v1048 = vsel %vm517, %v612, 0
        %v1051 = vsel %vm517, %v714, 0
        %1053 = vmatprep.subr.mxu0 0.0
        %1054 = vmatpush1.xpose.msra.mxu0 %v1051
        %1055 = vmatprep.subr.mxu0 0.0
        %1056 = vmatpush1.xpose.msra.mxu0 0.0
        %1057 = vmatprep.subr.mxu0 0.0
        %1058 = vmatpush1.xpose.msra.mxu0 0.0
        %1059 = vmatprep.subr.mxu0 0.0
        %1060 = vmatpush1.xpose.msra.mxu0 0.0
        %1061 = vmatprep.subr.mxu0 0.0
        %1062 = vmatpush1.xpose.msra.mxu0 0.0
        %1063 = vmatprep.subr.mxu0 0.0
        %1064 = vmatpush1.xpose.msra.mxu0 0.0
        %1065 = vmatprep.subr.mxu0 0.0
        %1066 = vmatpush1.xpose.msra.mxu0 0.0
        %1067 = vmatprep.subr.mxu0 0.0
        %1068 = vmatpush1.xpose.msra.mxu0 0.0
        %1069 = vmatprep.subr.mxu0 0.0
        %1070 = vmatpush1.xpose.msra.mxu0 0.0
        %1071 = vmatprep.subr.mxu0 0.0
        %1072 = vmatpush1.xpose.msra.mxu0 0.0
        %1073 = vmatprep.subr.mxu0 0.0
        %1074 = vmatpush1.xpose.msra.mxu0 0.0
        %1075 = vmatprep.subr.mxu0 0.0
        %1076 = vmatpush1.xpose.msra.mxu0 0.0
        %1077 = vmatprep.subr.mxu0 0.0
        %1078 = vmatpush1.xpose.msra.mxu0 0.0
        %1079 = vmatprep.subr.mxu0 0.0
        %1080 = vmatpush1.xpose.msra.mxu0 0.0
        %1081 = vmatprep.subr.mxu0 0.0
        %1082 = vmatpush1.xpose.msra.mxu0 0.0
        %1083 = vmatprep.subr.mxu0 0.0
        %1084 = vmatpush1.xpose.msra.mxu0 0.0
        %1085 = vmatprep.subr.mxu0 0.0
        %1086 = vmatpush1.xpose.msra.mxu0 0.0
        %1087 = vmatprep.subr.mxu0 0.0
        %1088 = vmatpush1.xpose.msra.mxu0 0.0
        %1089 = vmatprep.subr.mxu0 0.0
        %1090 = vmatpush1.xpose.msra.mxu0 0.0
        %1091 = vmatprep.subr.mxu0 0.0
        %1092 = vmatpush1.xpose.msra.mxu0 0.0
        %1093 = vmatprep.subr.mxu0 0.0
        %1094 = vmatpush1.xpose.msra.mxu0 0.0
        %1095 = vmatprep.subr.mxu0 0.0
        %1096 = vmatpush1.xpose.msra.mxu0 0.0
        %1097 = vmatprep.subr.mxu0 0.0
        %1098 = vmatpush1.xpose.msra.mxu0 0.0
        %1099 = vmatprep.subr.mxu0 0.0
        %1100 = vmatpush1.xpose.msra.mxu0 0.0
        %1101 = vmatprep.subr.mxu0 0.0
        %1102 = vmatpush1.xpose.msra.mxu0 0.0
        %1103 = vmatprep.subr.mxu0 0.0
        %1104 = vmatpush1.xpose.msra.mxu0 0.0
        %1105 = vmatprep.subr.mxu0 0.0
        %1106 = vmatpush1.xpose.msra.mxu0 0.0
        %1107 = vmatprep.subr.mxu0 0.0
        %1108 = vmatpush1.xpose.msra.mxu0 0.0
        %1109 = vmatprep.subr.mxu0 0.0
        %1110 = vmatpush1.xpose.msra.mxu0 0.0
        %1111 = vmatprep.subr.mxu0 0.0
        %1112 = vmatpush1.xpose.msra.mxu0 0.0
        %1113 = vmatprep.subr.mxu0 0.0
        %1114 = vmatpush1.xpose.msra.mxu0 0.0
        %1115 = vmatprep.subr.mxu0 0.0
        %1116 = vmatpush1.xpose.msra.mxu0 0.0
        %1117 = vmatprep.mubr.f32.mxu0 0.0
        %1118 = vmatmul.mubr.f32.gmra.mrb[0].mxu0 %v1048
        %v1119 = vpop.f32.mrb[0].mxu0
        %v1120 = vadd.f32 0.0, %v1119
        %v1121 = vpop.f32.mrb[0].mxu0
        %1122 = vdwg.mxu0
        %v1123 = vld [vmem:[%s454] sm:$0xff]
        %vm1124 = vcmp.eq.s32.totalorder %v1123, 0
        %v1125 = vsel %vm1124, 1, 0
        %vm1126 = vcmp.eq.s32.totalorder %v1125, 1
        %v1127 = vsel %vm1126, -1e+20, %v892
        %v1128 = vsel %vm1126, -1e+20, %v968
        %v1129 = vsel %vm1126, -1e+20, %v1044
        %v1130 = vsel %vm1126, -1e+20, %v1120
        %v1131 = vsel %vm517, %v1127, -inf
        %1132 = vmax.xlane.f32.xlu0 %v1131
        %v1133 = vpop.xlane.xlu0 %1132
        %v1134 = vsel %vm517, %v1128, -inf
        %1135 = vmax.xlane.f32.xlu0 %v1134
        %v1136 = vpop.xlane.xlu0 %1135
        %v1137 = vsel %vm517, %v1129, -inf
        %1138 = vmax.xlane.f32.xlu0 %v1137
        %v1139 = vpop.xlane.xlu0 %1138
        %v1140 = vsel %vm517, %v1130, -inf
        %1141 = vmax.xlane.f32.xlu0 %v1140
        %v1142 = vpop.xlane.xlu0 %1141
        %v1143 = vsub.f32 %v1127, %v1133
        %v1144 = vsub.f32 %v1128, %v1136
        %v1145 = vsub.f32 %v1129, %v1139
        %v1146 = vsub.f32 %v1130, %v1142
        %v1147 = vmul.f32 %v1143, 1.442695
        %v1148 = vpow.pop %v1147
        %v1149 = vmul.f32 %v1144, 1.442695
        %v1150 = vpow.pop %v1149
        %v1151 = vmul.f32 %v1145, 1.442695
        %v1152 = vpow.pop %v1151
        %v1153 = vmul.f32 %v1146, 1.442695
        %v1154 = vpow.pop %v1153
        %v1155 = vsel %vm517, %v1148, 0.0
        %1156 = vadd.xlane.f32.xlu0 %v1155
        %v1157 = vpop.xlane.xlu0 %1156
        %v1158 = vsel %vm517, %v1150, 0.0
        %1159 = vadd.xlane.f32.xlu0 %v1158
        %v1160 = vpop.xlane.xlu0 %1159
        %v1161 = vsel %vm517, %v1152, 0.0
        %1162 = vadd.xlane.f32.xlu0 %v1161
        %v1163 = vpop.xlane.xlu0 %1162
        %v1164 = vsel %vm517, %v1154, 0.0
        %1165 = vadd.xlane.f32.xlu0 %v1164
        %v1166 = vpop.xlane.xlu0 %1165
        %v1167 = vrcp.pop %v1157
        %v1168 = vrcp.pop %v1160
        %v1169 = vrcp.pop %v1163
        %v1170 = vrcp.pop %v1166
        %v1171 = vmul.f32 %v1148, %v1167
        %v1172 = vmul.f32 %v1150, %v1168
        %v1173 = vmul.f32 %v1152, %v1169
        %v1174 = vmul.f32 %v1154, %v1170
        %v1176 = vsel %vm517, %v1171, 0
        %1178 = vmatprep.subr.mxu0 0.0
        %1179 = vmatpush1.msra.mxu0 %v801
        %1180 = vmatprep.subr.mxu0 0.0
        %1181 = vmatpush1.msra.mxu0 0.0
        %1182 = vmatprep.subr.mxu0 0.0
        %1183 = vmatpush1.msra.mxu0 0.0
        %1184 = vmatprep.subr.mxu0 0.0
        %1185 = vmatpush1.msra.mxu0 0.0
        %1186 = vmatprep.subr.mxu0 0.0
        %1187 = vmatpush1.msra.mxu0 0.0
        %1188 = vmatprep.subr.mxu0 0.0
        %1189 = vmatpush1.msra.mxu0 0.0
        %1190 = vmatprep.subr.mxu0 0.0
        %1191 = vmatpush1.msra.mxu0 0.0
        %1192 = vmatprep.subr.mxu0 0.0
        %1193 = vmatpush1.msra.mxu0 0.0
        %1194 = vmatprep.subr.mxu0 0.0
        %1195 = vmatpush1.msra.mxu0 0.0
        %1196 = vmatprep.subr.mxu0 0.0
        %1197 = vmatpush1.msra.mxu0 0.0
        %1198 = vmatprep.subr.mxu0 0.0
        %1199 = vmatpush1.msra.mxu0 0.0
        %1200 = vmatprep.subr.mxu0 0.0
        %1201 = vmatpush1.msra.mxu0 0.0
        %1202 = vmatprep.subr.mxu0 0.0
        %1203 = vmatpush1.msra.mxu0 0.0
        %1204 = vmatprep.subr.mxu0 0.0
        %1205 = vmatpush1.msra.mxu0 0.0
        %1206 = vmatprep.subr.mxu0 0.0
        %1207 = vmatpush1.msra.mxu0 0.0
        %1208 = vmatprep.subr.mxu0 0.0
        %1209 = vmatpush1.msra.mxu0 0.0
        %1210 = vmatprep.subr.mxu0 0.0
        %1211 = vmatpush1.msra.mxu0 0.0
        %1212 = vmatprep.subr.mxu0 0.0
        %1213 = vmatpush1.msra.mxu0 0.0
        %1214 = vmatprep.subr.mxu0 0.0
        %1215 = vmatpush1.msra.mxu0 0.0
        %1216 = vmatprep.subr.mxu0 0.0
        %1217 = vmatpush1.msra.mxu0 0.0
        %1218 = vmatprep.subr.mxu0 0.0
        %1219 = vmatpush1.msra.mxu0 0.0
        %1220 = vmatprep.subr.mxu0 0.0
        %1221 = vmatpush1.msra.mxu0 0.0
        %1222 = vmatprep.subr.mxu0 0.0
        %1223 = vmatpush1.msra.mxu0 0.0
        %1224 = vmatprep.subr.mxu0 0.0
        %1225 = vmatpush1.msra.mxu0 0.0
        %1226 = vmatprep.subr.mxu0 0.0
        %1227 = vmatpush1.msra.mxu0 0.0
        %1228 = vmatprep.subr.mxu0 0.0
        %1229 = vmatpush1.msra.mxu0 0.0
        %1230 = vmatprep.subr.mxu0 0.0
        %1231 = vmatpush1.msra.mxu0 0.0
        %1232 = vmatprep.subr.mxu0 0.0
        %1233 = vmatpush1.msra.mxu0 0.0
        %1234 = vmatprep.subr.mxu0 0.0
        %1235 = vmatpush1.msra.mxu0 0.0
        %1236 = vmatprep.subr.mxu0 0.0
        %1237 = vmatpush1.msra.mxu0 0.0
        %1238 = vmatprep.subr.mxu0 0.0
        %1239 = vmatpush1.msra.mxu0 0.0
        %1240 = vmatprep.subr.mxu0 0.0
        %1241 = vmatpush1.msra.mxu0 0.0
        %1242 = vmatprep.mubr.f32.mxu0 0.0
        %1243 = vmatmul.mubr.f32.gmra.mrb[0].mxu0 %v1176
        %v1244 = vpop.f32.mrb[0].mxu0
        %v1245 = vadd.f32 0.0, %v1244
        %v1246 = vpop.f32.mrb[0].mxu0
        %1247 = vdwg.mxu0
        %v1249 = vsel %vm517, %v1172, 0
        %1251 = vmatprep.subr.mxu0 0.0
        %1252 = vmatpush1.msra.mxu0 %v806
        %1253 = vmatprep.subr.mxu0 0.0
        %1254 = vmatpush1.msra.mxu0 0.0
        %1255 = vmatprep.subr.mxu0 0.0
        %1256 = vmatpush1.msra.mxu0 0.0
        %1257 = vmatprep.subr.mxu0 0.0
        %1258 = vmatpush1.msra.mxu0 0.0
        %1259 = vmatprep.subr.mxu0 0.0
        %1260 = vmatpush1.msra.mxu0 0.0
        %1261 = vmatprep.subr.mxu0 0.0
        %1262 = vmatpush1.msra.mxu0 0.0
        %1263 = vmatprep.subr.mxu0 0.0
        %1264 = vmatpush1.msra.mxu0 0.0
        %1265 = vmatprep.subr.mxu0 0.0
        %1266 = vmatpush1.msra.mxu0 0.0
        %1267 = vmatprep.subr.mxu0 0.0
        %1268 = vmatpush1.msra.mxu0 0.0
        %1269 = vmatprep.subr.mxu0 0.0
        %1270 = vmatpush1.msra.mxu0 0.0
        %1271 = vmatprep.subr.mxu0 0.0
        %1272 = vmatpush1.msra.mxu0 0.0
        %1273 = vmatprep.subr.mxu0 0.0
        %1274 = vmatpush1.msra.mxu0 0.0
        %1275 = vmatprep.subr.mxu0 0.0
        %1276 = vmatpush1.msra.mxu0 0.0
        %1277 = vmatprep.subr.mxu0 0.0
        %1278 = vmatpush1.msra.mxu0 0.0
        %1279 = vmatprep.subr.mxu0 0.0
        %1280 = vmatpush1.msra.mxu0 0.0
        %1281 = vmatprep.subr.mxu0 0.0
        %1282 = vmatpush1.msra.mxu0 0.0
        %1283 = vmatprep.subr.mxu0 0.0
        %1284 = vmatpush1.msra.mxu0 0.0
        %1285 = vmatprep.subr.mxu0 0.0
        %1286 = vmatpush1.msra.mxu0 0.0
        %1287 = vmatprep.subr.mxu0 0.0
        %1288 = vmatpush1.msra.mxu0 0.0
        %1289 = vmatprep.subr.mxu0 0.0
        %1290 = vmatpush1.msra.mxu0 0.0
        %1291 = vmatprep.subr.mxu0 0.0
        %1292 = vmatpush1.msra.mxu0 0.0
        %1293 = vmatprep.subr.mxu0 0.0
        %1294 = vmatpush1.msra.mxu0 0.0
        %1295 = vmatprep.subr.mxu0 0.0
        %1296 = vmatpush1.msra.mxu0 0.0
        %1297 = vmatprep.subr.mxu0 0.0
        %1298 = vmatpush1.msra.mxu0 0.0
        %1299 = vmatprep.subr.mxu0 0.0
        %1300 = vmatpush1.msra.mxu0 0.0
        %1301 = vmatprep.subr.mxu0 0.0
        %1302 = vmatpush1.msra.mxu0 0.0
        %1303 = vmatprep.subr.mxu0 0.0
        %1304 = vmatpush1.msra.mxu0 0.0
        %1305 = vmatprep.subr.mxu0 0.0
        %1306 = vmatpush1.msra.mxu0 0.0
        %1307 = vmatprep.subr.mxu0 0.0
        %1308 = vmatpush1.msra.mxu0 0.0
        %1309 = vmatprep.subr.mxu0 0.0
        %1310 = vmatpush1.msra.mxu0 0.0
        %1311 = vmatprep.subr.mxu0 0.0
        %1312 = vmatpush1.msra.mxu0 0.0
        %1313 = vmatprep.subr.mxu0 0.0
        %1314 = vmatpush1.msra.mxu0 0.0
        %1315 = vmatprep.mubr.f32.mxu0 0.0
        %1316 = vmatmul.mubr.f32.gmra.mrb[0].mxu0 %v1249
        %v1317 = vpop.f32.mrb[0].mxu0
        %v1318 = vadd.f32 0.0, %v1317
        %v1319 = vpop.f32.mrb[0].mxu0
        %1320 = vdwg.mxu0
        %v1322 = vsel %vm517, %v1173, 0
        %1324 = vmatprep.subr.mxu0 0.0
        %1325 = vmatpush1.msra.mxu0 %v811
        %1326 = vmatprep.subr.mxu0 0.0
        %1327 = vmatpush1.msra.mxu0 0.0
        %1328 = vmatprep.subr.mxu0 0.0
        %1329 = vmatpush1.msra.mxu0 0.0
        %1330 = vmatprep.subr.mxu0 0.0
        %1331 = vmatpush1.msra.mxu0 0.0
        %1332 = vmatprep.subr.mxu0 0.0
        %1333 = vmatpush1.msra.mxu0 0.0
        %1334 = vmatprep.subr.mxu0 0.0
        %1335 = vmatpush1.msra.mxu0 0.0
        %1336 = vmatprep.subr.mxu0 0.0
        %1337 = vmatpush1.msra.mxu0 0.0
        %1338 = vmatprep.subr.mxu0 0.0
        %1339 = vmatpush1.msra.mxu0 0.0
        %1340 = vmatprep.subr.mxu0 0.0
        %1341 = vmatpush1.msra.mxu0 0.0
        %1342 = vmatprep.subr.mxu0 0.0
        %1343 = vmatpush1.msra.mxu0 0.0
        %1344 = vmatprep.subr.mxu0 0.0
        %1345 = vmatpush1.msra.mxu0 0.0
        %1346 = vmatprep.subr.mxu0 0.0
        %1347 = vmatpush1.msra.mxu0 0.0
        %1348 = vmatprep.subr.mxu0 0.0
        %1349 = vmatpush1.msra.mxu0 0.0
        %1350 = vmatprep.subr.mxu0 0.0
        %1351 = vmatpush1.msra.mxu0 0.0
        %1352 = vmatprep.subr.mxu0 0.0
        %1353 = vmatpush1.msra.mxu0 0.0
        %1354 = vmatprep.subr.mxu0 0.0
        %1355 = vmatpush1.msra.mxu0 0.0
        %1356 = vmatprep.subr.mxu0 0.0
        %1357 = vmatpush1.msra.mxu0 0.0
        %1358 = vmatprep.subr.mxu0 0.0
        %1359 = vmatpush1.msra.mxu0 0.0
        %1360 = vmatprep.subr.mxu0 0.0
        %1361 = vmatpush1.msra.mxu0 0.0
        %1362 = vmatprep.subr.mxu0 0.0
        %1363 = vmatpush1.msra.mxu0 0.0
        %1364 = vmatprep.subr.mxu0 0.0
        %1365 = vmatpush1.msra.mxu0 0.0
        %1366 = vmatprep.subr.mxu0 0.0
        %1367 = vmatpush1.msra.mxu0 0.0
        %1368 = vmatprep.subr.mxu0 0.0
        %1369 = vmatpush1.msra.mxu0 0.0
        %1370 = vmatprep.subr.mxu0 0.0
        %1371 = vmatpush1.msra.mxu0 0.0
        %1372 = vmatprep.subr.mxu0 0.0
        %1373 = vmatpush1.msra.mxu0 0.0
        %1374 = vmatprep.subr.mxu0 0.0
        %1375 = vmatpush1.msra.mxu0 0.0
        %1376 = vmatprep.subr.mxu0 0.0
        %1377 = vmatpush1.msra.mxu0 0.0
        %1378 = vmatprep.subr.mxu0 0.0
        %1379 = vmatpush1.msra.mxu0 0.0
        %1380 = vmatprep.subr.mxu0 0.0
        %1381 = vmatpush1.msra.mxu0 0.0
        %1382 = vmatprep.subr.mxu0 0.0
        %1383 = vmatpush1.msra.mxu0 0.0
        %1384 = vmatprep.subr.mxu0 0.0
        %1385 = vmatpush1.msra.mxu0 0.0
        %1386 = vmatprep.subr.mxu0 0.0
        %1387 = vmatpush1.msra.mxu0 0.0
        %1388 = vmatprep.mubr.f32.mxu0 0.0
        %1389 = vmatmul.mubr.f32.gmra.mrb[0].mxu0 %v1322
        %v1390 = vpop.f32.mrb[0].mxu0
        %v1391 = vadd.f32 0.0, %v1390
        %v1392 = vpop.f32.mrb[0].mxu0
        %1393 = vdwg.mxu0
        %v1395 = vsel %vm517, %v1174, 0
        %1397 = vmatprep.subr.mxu0 0.0
        %1398 = vmatpush1.msra.mxu0 %v816
        %1399 = vmatprep.subr.mxu0 0.0
        %1400 = vmatpush1.msra.mxu0 0.0
        %1401 = vmatprep.subr.mxu0 0.0
        %1402 = vmatpush1.msra.mxu0 0.0
        %1403 = vmatprep.subr.mxu0 0.0
        %1404 = vmatpush1.msra.mxu0 0.0
        %1405 = vmatprep.subr.mxu0 0.0
        %1406 = vmatpush1.msra.mxu0 0.0
        %1407 = vmatprep.subr.mxu0 0.0
        %1408 = vmatpush1.msra.mxu0 0.0
        %1409 = vmatprep.subr.mxu0 0.0
        %1410 = vmatpush1.msra.mxu0 0.0
        %1411 = vmatprep.subr.mxu0 0.0
        %1412 = vmatpush1.msra.mxu0 0.0
        %1413 = vmatprep.subr.mxu0 0.0
        %1414 = vmatpush1.msra.mxu0 0.0
        %1415 = vmatprep.subr.mxu0 0.0
        %1416 = vmatpush1.msra.mxu0 0.0
        %1417 = vmatprep.subr.mxu0 0.0
        %1418 = vmatpush1.msra.mxu0 0.0
        %1419 = vmatprep.subr.mxu0 0.0
        %1420 = vmatpush1.msra.mxu0 0.0
        %1421 = vmatprep.subr.mxu0 0.0
        %1422 = vmatpush1.msra.mxu0 0.0
        %1423 = vmatprep.subr.mxu0 0.0
        %1424 = vmatpush1.msra.mxu0 0.0
        %1425 = vmatprep.subr.mxu0 0.0
        %1426 = vmatpush1.msra.mxu0 0.0
        %1427 = vmatprep.subr.mxu0 0.0
        %1428 = vmatpush1.msra.mxu0 0.0
        %1429 = vmatprep.subr.mxu0 0.0
        %1430 = vmatpush1.msra.mxu0 0.0
        %1431 = vmatprep.subr.mxu0 0.0
        %1432 = vmatpush1.msra.mxu0 0.0
        %1433 = vmatprep.subr.mxu0 0.0
        %1434 = vmatpush1.msra.mxu0 0.0
        %1435 = vmatprep.subr.mxu0 0.0
        %1436 = vmatpush1.msra.mxu0 0.0
        %1437 = vmatprep.subr.mxu0 0.0
        %1438 = vmatpush1.msra.mxu0 0.0
        %1439 = vmatprep.subr.mxu0 0.0
        %1440 = vmatpush1.msra.mxu0 0.0
        %1441 = vmatprep.subr.mxu0 0.0
        %1442 = vmatpush1.msra.mxu0 0.0
        %1443 = vmatprep.subr.mxu0 0.0
        %1444 = vmatpush1.msra.mxu0 0.0
        %1445 = vmatprep.subr.mxu0 0.0
        %1446 = vmatpush1.msra.mxu0 0.0
        %1447 = vmatprep.subr.mxu0 0.0
        %1448 = vmatpush1.msra.mxu0 0.0
        %1449 = vmatprep.subr.mxu0 0.0
        %1450 = vmatpush1.msra.mxu0 0.0
        %1451 = vmatprep.subr.mxu0 0.0
        %1452 = vmatpush1.msra.mxu0 0.0
        %1453 = vmatprep.subr.mxu0 0.0
        %1454 = vmatpush1.msra.mxu0 0.0
        %1455 = vmatprep.subr.mxu0 0.0
        %1456 = vmatpush1.msra.mxu0 0.0
        %1457 = vmatprep.subr.mxu0 0.0
        %1458 = vmatpush1.msra.mxu0 0.0
        %1459 = vmatprep.subr.mxu0 0.0
        %1460 = vmatpush1.msra.mxu0 0.0
        %1461 = vmatprep.mubr.f32.mxu0 0.0
        %1462 = vmatmul.mubr.f32.gmra.mrb[0].mxu0 %v1395
        %v1463 = vpop.f32.mrb[0].mxu0
        %v1464 = vadd.f32 0.0, %v1463
        %v1465 = vpop.f32.mrb[0].mxu0
        %1466 = vdwg.mxu0
        %v1467 = vld [vmem:[#allocation11] sm:$0xff]
        %v1468 = vld [vmem:[#allocation11 + $0x8] sm:$0xff]
        %v1469 = vld [vmem:[#allocation11 + $0x10] sm:$0xff]
        %v1470 = vld [vmem:[#allocation11 + $0x18] sm:$0xff]
        %v1472 = vsel %vm517, %v1245, 0
        %1474 = vmatprep.subr.mxu0 0.0
        %1475 = vmatpush1.msra.mxu0 %v1467
        %1476 = vmatprep.subr.mxu0 0.0
        %1477 = vmatpush1.msra.mxu0 0.0
        %1478 = vmatprep.subr.mxu0 0.0
        %1479 = vmatpush1.msra.mxu0 0.0
        %1480 = vmatprep.subr.mxu0 0.0
        %1481 = vmatpush1.msra.mxu0 0.0
        %1482 = vmatprep.subr.mxu0 0.0
        %1483 = vmatpush1.msra.mxu0 0.0
        %1484 = vmatprep.subr.mxu0 0.0
        %1485 = vmatpush1.msra.mxu0 0.0
        %1486 = vmatprep.subr.mxu0 0.0
        %1487 = vmatpush1.msra.mxu0 0.0
        %1488 = vmatprep.subr.mxu0 0.0
        %1489 = vmatpush1.msra.mxu0 0.0
        %1490 = vmatprep.subr.mxu0 0.0
        %1491 = vmatpush1.msra.mxu0 0.0
        %1492 = vmatprep.subr.mxu0 0.0
        %1493 = vmatpush1.msra.mxu0 0.0
        %1494 = vmatprep.subr.mxu0 0.0
        %1495 = vmatpush1.msra.mxu0 0.0
        %1496 = vmatprep.subr.mxu0 0.0
        %1497 = vmatpush1.msra.mxu0 0.0
        %1498 = vmatprep.subr.mxu0 0.0
        %1499 = vmatpush1.msra.mxu0 0.0
        %1500 = vmatprep.subr.mxu0 0.0
        %1501 = vmatpush1.msra.mxu0 0.0
        %1502 = vmatprep.subr.mxu0 0.0
        %1503 = vmatpush1.msra.mxu0 0.0
        %1504 = vmatprep.subr.mxu0 0.0
        %1505 = vmatpush1.msra.mxu0 0.0
        %1506 = vmatprep.subr.mxu0 0.0
        %1507 = vmatpush1.msra.mxu0 0.0
        %1508 = vmatprep.subr.mxu0 0.0
        %1509 = vmatpush1.msra.mxu0 0.0
        %1510 = vmatprep.subr.mxu0 0.0
        %1511 = vmatpush1.msra.mxu0 0.0
        %1512 = vmatprep.subr.mxu0 0.0
        %1513 = vmatpush1.msra.mxu0 0.0
        %1514 = vmatprep.subr.mxu0 0.0
        %1515 = vmatpush1.msra.mxu0 0.0
        %1516 = vmatprep.subr.mxu0 0.0
        %1517 = vmatpush1.msra.mxu0 0.0
        %1518 = vmatprep.subr.mxu0 0.0
        %1519 = vmatpush1.msra.mxu0 0.0
        %1520 = vmatprep.subr.mxu0 0.0
        %1521 = vmatpush1.msra.mxu0 0.0
        %1522 = vmatprep.subr.mxu0 0.0
        %1523 = vmatpush1.msra.mxu0 0.0
        %1524 = vmatprep.subr.mxu0 0.0
        %1525 = vmatpush1.msra.mxu0 0.0
        %1526 = vmatprep.subr.mxu0 0.0
        %1527 = vmatpush1.msra.mxu0 0.0
        %1528 = vmatprep.subr.mxu0 0.0
        %1529 = vmatpush1.msra.mxu0 0.0
        %1530 = vmatprep.subr.mxu0 0.0
        %1531 = vmatpush1.msra.mxu0 0.0
        %1532 = vmatprep.subr.mxu0 0.0
        %1533 = vmatpush1.msra.mxu0 0.0
        %1534 = vmatprep.subr.mxu0 0.0
        %1535 = vmatpush1.msra.mxu0 0.0
        %1536 = vmatprep.subr.mxu0 0.0
        %1537 = vmatpush1.msra.mxu0 0.0
        %1538 = vmatprep.mubr.f32.mxu0 0.0
        %1539 = vmatmul.mubr.f32.gmra.mrb[0].mxu0 %v1472
        %v1540 = vpop.f32.mrb[0].mxu0
        %v1541 = vadd.f32 0.0, %v1540
        %v1542 = vpop.f32.mrb[0].mxu0
        %1543 = vdwg.mxu0
        %v1545 = vsel %vm517, %v1318, 0
        %1547 = vmatprep.subr.mxu0 0.0
        %1548 = vmatpush1.msra.mxu0 %v1468
        %1549 = vmatprep.subr.mxu0 0.0
        %1550 = vmatpush1.msra.mxu0 0.0
        %1551 = vmatprep.subr.mxu0 0.0
        %1552 = vmatpush1.msra.mxu0 0.0
        %1553 = vmatprep.subr.mxu0 0.0
        %1554 = vmatpush1.msra.mxu0 0.0
        %1555 = vmatprep.subr.mxu0 0.0
        %1556 = vmatpush1.msra.mxu0 0.0
        %1557 = vmatprep.subr.mxu0 0.0
        %1558 = vmatpush1.msra.mxu0 0.0
        %1559 = vmatprep.subr.mxu0 0.0
        %1560 = vmatpush1.msra.mxu0 0.0
        %1561 = vmatprep.subr.mxu0 0.0
        %1562 = vmatpush1.msra.mxu0 0.0
        %1563 = vmatprep.subr.mxu0 0.0
        %1564 = vmatpush1.msra.mxu0 0.0
        %1565 = vmatprep.subr.mxu0 0.0
        %1566 = vmatpush1.msra.mxu0 0.0
        %1567 = vmatprep.subr.mxu0 0.0
        %1568 = vmatpush1.msra.mxu0 0.0
        %1569 = vmatprep.subr.mxu0 0.0
        %1570 = vmatpush1.msra.mxu0 0.0
        %1571 = vmatprep.subr.mxu0 0.0
        %1572 = vmatpush1.msra.mxu0 0.0
        %1573 = vmatprep.subr.mxu0 0.0
        %1574 = vmatpush1.msra.mxu0 0.0
        %1575 = vmatprep.subr.mxu0 0.0
        %1576 = vmatpush1.msra.mxu0 0.0
        %1577 = vmatprep.subr.mxu0 0.0
        %1578 = vmatpush1.msra.mxu0 0.0
        %1579 = vmatprep.subr.mxu0 0.0
        %1580 = vmatpush1.msra.mxu0 0.0
        %1581 = vmatprep.subr.mxu0 0.0
        %1582 = vmatpush1.msra.mxu0 0.0
        %1583 = vmatprep.subr.mxu0 0.0
        %1584 = vmatpush1.msra.mxu0 0.0
        %1585 = vmatprep.subr.mxu0 0.0
        %1586 = vmatpush1.msra.mxu0 0.0
        %1587 = vmatprep.subr.mxu0 0.0
        %1588 = vmatpush1.msra.mxu0 0.0
        %1589 = vmatprep.subr.mxu0 0.0
        %1590 = vmatpush1.msra.mxu0 0.0
        %1591 = vmatprep.subr.mxu0 0.0
        %1592 = vmatpush1.msra.mxu0 0.0
        %1593 = vmatprep.subr.mxu0 0.0
        %1594 = vmatpush1.msra.mxu0 0.0
        %1595 = vmatprep.subr.mxu0 0.0
        %1596 = vmatpush1.msra.mxu0 0.0
        %1597 = vmatprep.subr.mxu0 0.0
        %1598 = vmatpush1.msra.mxu0 0.0
        %1599 = vmatprep.subr.mxu0 0.0
        %1600 = vmatpush1.msra.mxu0 0.0
        %1601 = vmatprep.subr.mxu0 0.0
        %1602 = vmatpush1.msra.mxu0 0.0
        %1603 = vmatprep.subr.mxu0 0.0
        %1604 = vmatpush1.msra.mxu0 0.0
        %1605 = vmatprep.subr.mxu0 0.0
        %1606 = vmatpush1.msra.mxu0 0.0
        %1607 = vmatprep.subr.mxu0 0.0
        %1608 = vmatpush1.msra.mxu0 0.0
        %1609 = vmatprep.subr.mxu0 0.0
        %1610 = vmatpush1.msra.mxu0 0.0
        %1611 = vmatprep.mubr.f32.mxu0 0.0
        %1612 = vmatmul.mubr.f32.gmra.mrb[0].mxu0 %v1545
        %v1613 = vpop.f32.mrb[0].mxu0
        %v1614 = vadd.f32 0.0, %v1613
        %v1615 = vpop.f32.mrb[0].mxu0
        %1616 = vdwg.mxu0
        %v1618 = vsel %vm517, %v1391, 0
        %1620 = vmatprep.subr.mxu0 0.0
        %1621 = vmatpush1.msra.mxu0 %v1469
        %1622 = vmatprep.subr.mxu0 0.0
        %1623 = vmatpush1.msra.mxu0 0.0
        %1624 = vmatprep.subr.mxu0 0.0
        %1625 = vmatpush1.msra.mxu0 0.0
        %1626 = vmatprep.subr.mxu0 0.0
        %1627 = vmatpush1.msra.mxu0 0.0
        %1628 = vmatprep.subr.mxu0 0.0
        %1629 = vmatpush1.msra.mxu0 0.0
        %1630 = vmatprep.subr.mxu0 0.0
        %1631 = vmatpush1.msra.mxu0 0.0
        %1632 = vmatprep.subr.mxu0 0.0
        %1633 = vmatpush1.msra.mxu0 0.0
        %1634 = vmatprep.subr.mxu0 0.0
        %1635 = vmatpush1.msra.mxu0 0.0
        %1636 = vmatprep.subr.mxu0 0.0
        %1637 = vmatpush1.msra.mxu0 0.0
        %1638 = vmatprep.subr.mxu0 0.0
        %1639 = vmatpush1.msra.mxu0 0.0
        %1640 = vmatprep.subr.mxu0 0.0
        %1641 = vmatpush1.msra.mxu0 0.0
        %1642 = vmatprep.subr.mxu0 0.0
        %1643 = vmatpush1.msra.mxu0 0.0
        %1644 = vmatprep.subr.mxu0 0.0
        %1645 = vmatpush1.msra.mxu0 0.0
        %1646 = vmatprep.subr.mxu0 0.0
        %1647 = vmatpush1.msra.mxu0 0.0
        %1648 = vmatprep.subr.mxu0 0.0
        %1649 = vmatpush1.msra.mxu0 0.0
        %1650 = vmatprep.subr.mxu0 0.0
        %1651 = vmatpush1.msra.mxu0 0.0
        %1652 = vmatprep.subr.mxu0 0.0
        %1653 = vmatpush1.msra.mxu0 0.0
        %1654 = vmatprep.subr.mxu0 0.0
        %1655 = vmatpush1.msra.mxu0 0.0
        %1656 = vmatprep.subr.mxu0 0.0
        %1657 = vmatpush1.msra.mxu0 0.0
        %1658 = vmatprep.subr.mxu0 0.0
        %1659 = vmatpush1.msra.mxu0 0.0
        %1660 = vmatprep.subr.mxu0 0.0
        %1661 = vmatpush1.msra.mxu0 0.0
        %1662 = vmatprep.subr.mxu0 0.0
        %1663 = vmatpush1.msra.mxu0 0.0
        %1664 = vmatprep.subr.mxu0 0.0
        %1665 = vmatpush1.msra.mxu0 0.0
        %1666 = vmatprep.subr.mxu0 0.0
        %1667 = vmatpush1.msra.mxu0 0.0
        %1668 = vmatprep.subr.mxu0 0.0
        %1669 = vmatpush1.msra.mxu0 0.0
        %1670 = vmatprep.subr.mxu0 0.0
        %1671 = vmatpush1.msra.mxu0 0.0
        %1672 = vmatprep.subr.mxu0 0.0
        %1673 = vmatpush1.msra.mxu0 0.0
        %1674 = vmatprep.subr.mxu0 0.0
        %1675 = vmatpush1.msra.mxu0 0.0
        %1676 = vmatprep.subr.mxu0 0.0
        %1677 = vmatpush1.msra.mxu0 0.0
        %1678 = vmatprep.subr.mxu0 0.0
        %1679 = vmatpush1.msra.mxu0 0.0
        %1680 = vmatprep.subr.mxu0 0.0
        %1681 = vmatpush1.msra.mxu0 0.0
        %1682 = vmatprep.subr.mxu0 0.0
        %1683 = vmatpush1.msra.mxu0 0.0
        %1684 = vmatprep.mubr.f32.mxu0 0.0
        %1685 = vmatmul.mubr.f32.gmra.mrb[0].mxu0 %v1618
        %v1686 = vpop.f32.mrb[0].mxu0
        %v1687 = vadd.f32 0.0, %v1686
        %v1688 = vpop.f32.mrb[0].mxu0
        %1689 = vdwg.mxu0
        %v1691 = vsel %vm517, %v1464, 0
        %1693 = vmatprep.subr.mxu0 0.0
        %1694 = vmatpush1.msra.mxu0 %v1470
        %1695 = vmatprep.subr.mxu0 0.0
        %1696 = vmatpush1.msra.mxu0 0.0
        %1697 = vmatprep.subr.mxu0 0.0
        %1698 = vmatpush1.msra.mxu0 0.0
        %1699 = vmatprep.subr.mxu0 0.0
        %1700 = vmatpush1.msra.mxu0 0.0
        %1701 = vmatprep.subr.mxu0 0.0
        %1702 = vmatpush1.msra.mxu0 0.0
        %1703 = vmatprep.subr.mxu0 0.0
        %1704 = vmatpush1.msra.mxu0 0.0
        %1705 = vmatprep.subr.mxu0 0.0
        %1706 = vmatpush1.msra.mxu0 0.0
        %1707 = vmatprep.subr.mxu0 0.0
        %1708 = vmatpush1.msra.mxu0 0.0
        %1709 = vmatprep.subr.mxu0 0.0
        %1710 = vmatpush1.msra.mxu0 0.0
        %1711 = vmatprep.subr.mxu0 0.0
        %1712 = vmatpush1.msra.mxu0 0.0
        %1713 = vmatprep.subr.mxu0 0.0
        %1714 = vmatpush1.msra.mxu0 0.0
        %1715 = vmatprep.subr.mxu0 0.0
        %1716 = vmatpush1.msra.mxu0 0.0
        %1717 = vmatprep.subr.mxu0 0.0
        %1718 = vmatpush1.msra.mxu0 0.0
        %1719 = vmatprep.subr.mxu0 0.0
        %1720 = vmatpush1.msra.mxu0 0.0
        %1721 = vmatprep.subr.mxu0 0.0
        %1722 = vmatpush1.msra.mxu0 0.0
        %1723 = vmatprep.subr.mxu0 0.0
        %1724 = vmatpush1.msra.mxu0 0.0
        %1725 = vmatprep.subr.mxu0 0.0
        %1726 = vmatpush1.msra.mxu0 0.0
        %1727 = vmatprep.subr.mxu0 0.0
        %1728 = vmatpush1.msra.mxu0 0.0
        %1729 = vmatprep.subr.mxu0 0.0
        %1730 = vmatpush1.msra.mxu0 0.0
        %1731 = vmatprep.subr.mxu0 0.0
        %1732 = vmatpush1.msra.mxu0 0.0
        %1733 = vmatprep.subr.mxu0 0.0
        %1734 = vmatpush1.msra.mxu0 0.0
        %1735 = vmatprep.subr.mxu0 0.0
        %1736 = vmatpush1.msra.mxu0 0.0
        %1737 = vmatprep.subr.mxu0 0.0
        %1738 = vmatpush1.msra.mxu0 0.0
        %1739 = vmatprep.subr.mxu0 0.0
        %1740 = vmatpush1.msra.mxu0 0.0
        %1741 = vmatprep.subr.mxu0 0.0
        %1742 = vmatpush1.msra.mxu0 0.0
        %1743 = vmatprep.subr.mxu0 0.0
        %1744 = vmatpush1.msra.mxu0 0.0
        %1745 = vmatprep.subr.mxu0 0.0
        %1746 = vmatpush1.msra.mxu0 0.0
        %1747 = vmatprep.subr.mxu0 0.0
        %1748 = vmatpush1.msra.mxu0 0.0
        %1749 = vmatprep.subr.mxu0 0.0
        %1750 = vmatpush1.msra.mxu0 0.0
        %1751 = vmatprep.subr.mxu0 0.0
        %1752 = vmatpush1.msra.mxu0 0.0
        %1753 = vmatprep.subr.mxu0 0.0
        %1754 = vmatpush1.msra.mxu0 0.0
        %1755 = vmatprep.subr.mxu0 0.0
        %1756 = vmatpush1.msra.mxu0 0.0
        %1757 = vmatprep.mubr.f32.mxu0 0.0
        %1758 = vmatmul.mubr.f32.gmra.mrb[0].mxu0 %v1691
        %v1759 = vpop.f32.mrb[0].mxu0
        %v1760 = vadd.f32 0.0, %v1759
        %v1761 = vpop.f32.mrb[0].mxu0
        %1762 = vdwg.mxu0
        %vm1763 = vcmask 261120
        %v1764 = vsel %vm1763, %v1541, 0.0
        %v1765 = vsel %vm1763, %v1614, 0.0
        %v1766 = vadd.f32 %v1764, %v1765
        %v1767 = vsel %vm1763, %v1687, 0.0
        %v1768 = vadd.f32 %v1766, %v1767
        %v1769 = vsel %vm1763, %v1760, 0.0
        %v1770 = vadd.f32 %v1768, %v1769
        %v1771 = vld [vmem:[%s8] sm:$0x1]
        %v1773 = vlaneseq
        %v1774 = vshrl.u32 %v1773, 7
        %v1775 = vsub.s32 0, %v1774
        %v1776 = vrot.slane %v1771, %v1775
        %v1778 = vadd.f32 %v1770, %v1776
        %1779 = vst.msk [vmem:[%s511] sm:$0xff] %vm1763, %v1778
        %s1780 = sand.u32 %s268, 1
        %s1781 = scalar_lea.sflag [#allocation4], %s1780
        %s1782 = sand.u32 %s268, 1
        %s1783 = smul.addr %s1782, 8
        %s1784 = scalar_lea.vmem [#allocation13], %s1783
        // Predicated region
        $region81: #{tpu_custom_call.1} parent=55 // pred_check
          %p1785 = pneg %p278
        $region82: #{tpu_custom_call.1} parent=55 // pred_check_branch
          %1787 = sbr.rel (%p1785) target = $region84
        $region83: #{tpu_custom_call.1} parent=55 // pred_region
          %s1789 = ssub.s32 128, 128
          %1790 = vsyncadd %s1781, %s1789
          %s1791 = sadd.s32 %s38, %s37
          %s1792 = smul.addr %s1791, 128
          %s1793 = scalar_lea.hbm %s9, %s1792
          %s1795 = sshll.u32 %s1784, 4
          %s1796 = int_to_ptr.vmem [resolvable:$true] %s1795
          %1798 = dma.vmem_to_hbm [thread:$0]  %s1796, 128, %s1793, %s1781
        $region84: #{tpu_custom_call.1} parent=55 // pred_fallthru
          _
      $region56: #{tpu_custom_call.1} parent=5 // pred_fallthru
        _
      %p1799 = scmp.le.s32.totalorder 2, %s28
      // Predicated region
      $region85: #{tpu_custom_call.1} parent=5 // pred_check
        %p1800 = pneg %p1799
      $region86: #{tpu_custom_call.1} parent=5 // pred_check_branch
        %1802 = sbr.rel (%p1800) target = $region88
      $region87: #{tpu_custom_call.1} parent=5 // pred_region
        %s1803 = ssub.s32 %s28, 2
        // Predicated region
        $region89: #{tpu_custom_call.1} parent=87 // pred_check
          %p1804 = pneg %p284
        $region90: #{tpu_custom_call.1} parent=87 // pred_check_branch
          %1806 = sbr.rel (%p1804) target = $region92
        $region91: #{tpu_custom_call.1} parent=87 // pred_region
          %s1807 = sand.u32 %s269, 1
          %s1808 = scalar_lea.sflag [#allocation4], %s1807
          %s1809 = sand.u32 %s269, 1
          %s1810 = smul.addr %s1809, 8
          %s1811 = scalar_lea.vmem [#allocation13], %s1810
          %1812 = dma.done %s1808, 128
        $region92: #{tpu_custom_call.1} parent=87 // pred_fallthru
          _
      $region88: #{tpu_custom_call.1} parent=5 // pred_fallthru
        _
    $region6: #{tpu_custom_call.1} parent=1 // loop_footer
      %s32 = sadd.s32 1, %s28
    $region7: #{tpu_custom_call.1} parent=1 // loop_footer_branch
      %27 = sbr.rel target = $region3
    $region8: #{tpu_custom_call.1} parent=1 // loop_exit
      _
    %1813 = vsyncpa [#allocation3], 1
    %s1814 = scalar_lea.sflag [#allocation3], 1
    %1815 = vsyncpa %s1814, 1
    %1816 = vsyncpa [#allocation6], 1
    %s1817 = scalar_lea.sflag [#allocation6], 1
    %1818 = vsyncpa %s1817, 1
    %1819 = vsyncpa [#allocation9], 1
    %s1820 = scalar_lea.sflag [#allocation9], 1
    %1821 = vsyncpa %s1820, 1
    %1822 = vsyncpa [#allocation12], 1
    %1823 = vsyncpa [#allocation4], 1
    %s1824 = scalar_lea.sflag [#allocation4], 1
    %1825 = vsyncpa %s1824, 1

</llo_original>
